<compile_context>
chip_gen: v5e
topology: v5e:2x2
jax: 0.10.0
libtpu: 0.0.40
codegen_flags: <defaults>
</compile_context>

<pallas_src>
import math
import functools

import numpy as np
import jax
import jax.numpy as jnp
from jax.experimental import pallas as pl
from jax.experimental.pallas import tpu as pltpu

H = 5       # number of attention "heads" (W_q1..W_q5 / W_k1..W_k5)
QPAD = 128  # Q-projection columns padded to one full lane group (H*Dk <= 128)


def _cdiv(a, b):
    return -(-a // b)


def _round_up(a, b):
    return _cdiv(a, b) * b


def _self_attention_kernel(x_ref, wproj_ref, r_ref, o_ref, *, C, D, Dk):
    # x_ref    : (tm, C*D)            bf16 tile of token rows
    # wproj_ref: (C*D, QPAD + C*H*Dk) bf16 fused [Wq (scaled) | 0-pad | block-diag Wk]
    # r_ref    : (C*H*Dk, H*C)        bf16 0/1 matrix summing each Dk group -> col h*C + c
    # o_ref    : (tm, H*D)            f32 concatenated attention outputs
    HDk = H * Dk

    x_bf = x_ref[...]                                   # (tm, C*D) bf16 (MXU operand)
    x_f32 = x_bf.astype(jnp.float32)                    # f32 copy for VPU math

    # ONE fused projection dot (Q for all heads + block-diagonal K for all
    # channels/heads), bf16 operands, f32 accumulation.
    proj = jnp.dot(x_bf, wproj_ref[...],
                   preferred_element_type=jnp.float32)  # (tm, QPAD + C*H*Dk)
    q = proj[:, :HDk]                                   # (tm, H*Dk), 1/sqrt(Dk) pre-folded
    k = proj[:, QPAD:QPAD + C * HDk]                    # (tm, C*H*Dk), 128-aligned slice

    # Tile Q across channels so lanes line up with K's (c, h, t) layout, then
    # reduce each Dk group on the MXU via the 0/1 matrix (exact in bf16/f32 acc).
    qt = jnp.tile(q, (1, C))                            # (tm, C*H*Dk)
    kq = (k * qt).astype(jnp.bfloat16)
    qk = jnp.dot(kq, r_ref[...],
                 preferred_element_type=jnp.float32)    # (tm, H*C) logits (pre-scaled)

    # Per-channel views of x (f32), reused by every head.
    xc = [x_f32[:, c * D:(c + 1) * D] for c in range(C)]

    atts = []
    for h in range(H):
        logits = qk[:, h * C:(h + 1) * C]               # (tm, C)
        m = jnp.max(logits, axis=-1, keepdims=True)
        e = jnp.exp(logits - m)
        inv = pl.reciprocal(jnp.sum(e, axis=-1, keepdims=True), approx=True)
        s = e * inv                                     # (tm, C) softmax scores (f32)

        att = s[:, 0:1] * xc[0]
        for c in range(1, C):
            att = att + s[:, c:c + 1] * xc[c]           # (tm, D)
        atts.append(att)

    # Single dense store of the whole (tm, H*D) output slab.
    o_ref[...] = jnp.concatenate(atts, axis=-1).astype(o_ref.dtype)


def prepare_self_attention_weights(wq_all, wk_all, *, D, Dk, C):
    """One-time weight fusion (do NOT rebuild per forward call).

    wq_all: (H, C, D, Dk), wk_all: (H, D, Dk)  ->  (w_proj bf16, r_mat bf16)
    """
    HDk = H * Dk
    assert HDk <= QPAD, "Q block must fit in one 128-lane group"
    scale = 1.0 / math.sqrt(Dk)

    # Fused, pre-scaled Q weight: wq_f[c*D + d, h*Dk + t] = Wq[h, c, d, t] / sqrt(Dk)
    wq_f = jnp.reshape(jnp.transpose(wq_all, (1, 2, 0, 3)), (C * D, HDk)) * scale

    # Block-diagonal K weight: wk_b[c*D + d, c*(H*Dk) + h*Dk + t] = Wk[h, d, t]
    wk_hd = jnp.reshape(jnp.transpose(wk_all, (1, 0, 2)), (D, HDk))
    wk_b = jnp.kron(jnp.eye(C, dtype=wk_hd.dtype), wk_hd)       # (C*D, C*H*Dk)

    # Zero-pad the Q block to QPAD columns so the K slice is vreg-aligned.
    pad = jnp.zeros((C * D, QPAD - HDk), dtype=wq_f.dtype)
    w_proj = jnp.concatenate([wq_f, pad, wk_b], axis=1).astype(jnp.bfloat16)

    # 0/1 reduction matrix: sums each Dk group of (k*qt) into column h*C + c.
    r_np = np.zeros((C * HDk, H * C), dtype=np.float32)
    for c in range(C):
        for h in range(H):
            r_np[c * HDk + h * Dk: c * HDk + (h + 1) * Dk, h * C + c] = 1.0
    r_mat = jnp.asarray(r_np, dtype=jnp.bfloat16)               # exact 0/1 in bf16

    return w_proj, r_mat


def self_attention_pallas(x, w_proj, r_mat, *, Tot, D, Dk, C, tm=1024):
    """x: (N, Tot, D); w_proj/r_mat from prepare_self_attention_weights()."""
    N = x.shape[0]
    L = Tot // C
    M = N * L
    HDk = H * Dk
    wcols = QPAD + C * HDk

    # Stream activations as bf16 (halves HBM read bytes).
    x_rows = jnp.reshape(x, (M, C * D)).astype(jnp.bfloat16)    # (M, C*D)

    # ---- tiling: >=2 tiles and an even tile count (v7x has 2 TensorCores) ----
    n_tiles = max(2, _cdiv(M, tm))
    if n_tiles % 2:
        n_tiles += 1
    tm_eff = _round_up(_cdiv(M, n_tiles), 8)      # 8-aligned rows per tile
    n_tiles = _cdiv(M, tm_eff)
    if n_tiles % 2:
        n_tiles += 1                              # at most one (mostly empty) pad tile
    M_pad = n_tiles * tm_eff
    if M_pad != M:
        x_rows = jnp.pad(x_rows, ((0, M_pad - M), (0, 0)))

    kernel = functools.partial(_self_attention_kernel, C=C, D=D, Dk=Dk)

    out = pl.pallas_call(
        kernel,
        out_shape=jax.ShapeDtypeStruct((M_pad, H * D), jnp.float32),
        grid_spec=pltpu.PrefetchScalarGridSpec(
            num_scalar_prefetch=0,
            grid=(n_tiles,),
            in_specs=[
                pl.BlockSpec((tm_eff, C * D), lambda i: (i, 0)),
                pl.BlockSpec((C * D, wcols), lambda i: (0, 0)),   # VMEM-resident weights
                pl.BlockSpec((C * HDk, H * C), lambda i: (0, 0)),
            ],
            out_specs=pl.BlockSpec((tm_eff, H * D), lambda i: (i, 0)),
        ),
        compiler_params=pltpu.CompilerParams(
            dimension_semantics=("parallel",),    # shard tiles across TCs on v7x
            vmem_limit_bytes=32 * 1024 * 1024,
        ),
    )(x_rows, w_proj, r_mat)

    return jnp.reshape(out[:M], (N, L, H * D))


def self_attention_reference(x, wq_all, wk_all, *, Tot, D, Dk, C):
    """Pure-JAX f32 reference mirroring the PyTorch forward exactly."""
    N = x.shape[0]
    xr = jnp.reshape(x, (N, Tot // C, C, D))
    atts = []
    for h in range(H):
        Wq = wq_all[h]  # (C, D, Dk)
        Wk = wk_all[h]  # (D, Dk)
        Q = jnp.einsum('nlcd,cdt->nlt', xr, Wq)
        K = jnp.einsum('nlcd,dt->nlct', xr, Wk)
        QK = jnp.einsum('nlct,nlt->nlc', K, Q) / math.sqrt(Dk)
        score = jax.nn.softmax(QK, axis=2)
        atts.append(jnp.einsum('nlc,nlcd->nld', score, xr))
    return jnp.concatenate(atts, axis=-1)


if __name__ == "__main__":
    # Small, shape-consistent configuration (D=56 as in the PyTorch module).
    N, Tot, D, Dk, C = 4, 64, 56, 16, 4   # L = Tot // C = 16

    key = jax.random.PRNGKey(0)
    kx, kq, kk = jax.random.split(key, 3)

    x = jax.random.normal(kx, (N, Tot, D), dtype=jnp.float32)

    # Parameter init matching reset_parameters():
    #   W_q ~ U(-1/sqrt(C), 1/sqrt(C)),  W_k ~ U(-1/sqrt(D), 1/sqrt(D))
    stdv_q = 1.0 / math.sqrt(C)
    stdv_k = 1.0 / math.sqrt(D)
    wq_all = jax.random.uniform(kq, (H, C, D, Dk), dtype=jnp.float32,
                                minval=-stdv_q, maxval=stdv_q)
    wk_all = jax.random.uniform(kk, (H, D, Dk), dtype=jnp.float32,
                                minval=-stdv_k, maxval=stdv_k)

    # One-time weight fusion, then a jitted forward that reuses it.
    w_proj, r_mat = prepare_self_attention_weights(wq_all, wk_all, D=D, Dk=Dk, C=C)
    attn = jax.jit(functools.partial(self_attention_pallas,
                                     Tot=Tot, D=D, Dk=Dk, C=C))

    out = attn(x, w_proj, r_mat)
    out = jax.block_until_ready(out)

    ref = self_attention_reference(x, wq_all, wk_all, Tot=Tot, D=D, Dk=Dk, C=C)
    assert out.shape == (N, Tot // C, H * D), out.shape
    # bf16 MXU operands + bf16-streamed activations + approx reciprocal =>
    # relaxed tolerance vs. the pure-f32 reference (structural bugs still give
    # O(1) mismatches and would fail this check).
    err = float(jnp.max(jnp.abs(out - ref)))
    assert jnp.allclose(out, ref, atol=1e-1, rtol=5e-2), err

    print("KERNEL_OK")
</pallas_src>

<mosaic_0001>
module attributes {stable_mosaic.version = 11 : i64} {
  func.func @_self_attention_kernel(%arg0: i32, %arg1: memref<32x224xbf16, #tpu.memory_space<vmem>>, %arg2: memref<224x448xbf16, #tpu.memory_space<vmem>>, %arg3: memref<320x20xbf16, #tpu.memory_space<vmem>>, %arg4: memref<32x280xf32, #tpu.memory_space<vmem>>) attributes {dimension_semantics = [#tpu.dimension_semantics<parallel>], iteration_bounds = array<i64: 2>, scalar_prefetch = 0 : i64, scratch_operands = 0 : i64, tpu.core_type = #tpu.core_type<tc>, window_params = [{transform_indices = @transform_0, window_bounds = array<i64: 32, 224>}, {pipeline_mode = #tpu.pipeline_mode<synchronous>, transform_indices = @transform_1, window_bounds = array<i64: 224, 448>}, {pipeline_mode = #tpu.pipeline_mode<synchronous>, transform_indices = @transform_2, window_bounds = array<i64: 320, 20>}, {transform_indices = @transform_3, window_bounds = array<i64: 32, 280>}]} {
    %c0 = arith.constant 0 : index
    %c0_0 = arith.constant 0 : index
    %0 = vector.load %arg1[%c0, %c0_0] : memref<32x224xbf16, #tpu.memory_space<vmem>>, vector<32x224xbf16>
    %1 = arith.extf %0 : vector<32x224xbf16> to vector<32x224xf32>
    %c0_1 = arith.constant 0 : index
    %c0_2 = arith.constant 0 : index
    %2 = vector.load %arg2[%c0_1, %c0_2] : memref<224x448xbf16, #tpu.memory_space<vmem>>, vector<224x448xbf16>
    %cst = arith.constant dense<0.000000e+00> : vector<32x448xf32>
    %3 = tpu.matmul %0, %2, %cst {dimension_numbers = #tpu.dot_dimension_numbers<[1], [0], [0], [1], [0, 0, 1, 1], [], []>} : vector<32x224xbf16>, vector<224x448xbf16>, vector<32x448xf32> -> vector<32x448xf32>
    %4 = vector.extract_strided_slice %3 {offsets = [0, 0], sizes = [32, 80], strides = [1, 1]} : vector<32x448xf32> to vector<32x80xf32>
    %5 = vector.extract_strided_slice %3 {offsets = [0, 128], sizes = [32, 320], strides = [1, 1]} : vector<32x448xf32> to vector<32x320xf32>
    %6 = tpu.concatenate %4, %4, %4, %4 in 1 : vector<32x80xf32>, vector<32x80xf32>, vector<32x80xf32>, vector<32x80xf32> -> vector<32x320xf32>
    %7 = arith.mulf %5, %6 : vector<32x320xf32>
    %8 = arith.truncf %7 : vector<32x320xf32> to vector<32x320xbf16>
    %c0_3 = arith.constant 0 : index
    %c0_4 = arith.constant 0 : index
    %9 = vector.load %arg3[%c0_3, %c0_4] : memref<320x20xbf16, #tpu.memory_space<vmem>>, vector<320x20xbf16>
    %cst_5 = arith.constant dense<0.000000e+00> : vector<32x20xf32>
    %10 = tpu.matmul %8, %9, %cst_5 {dimension_numbers = #tpu.dot_dimension_numbers<[1], [0], [0], [1], [0, 0, 1, 1], [], []>} : vector<32x320xbf16>, vector<320x20xbf16>, vector<32x20xf32> -> vector<32x20xf32>
    %11 = vector.extract_strided_slice %1 {offsets = [0, 0], sizes = [32, 56], strides = [1, 1]} : vector<32x224xf32> to vector<32x56xf32>
    %12 = vector.extract_strided_slice %1 {offsets = [0, 56], sizes = [32, 56], strides = [1, 1]} : vector<32x224xf32> to vector<32x56xf32>
    %13 = vector.extract_strided_slice %1 {offsets = [0, 112], sizes = [32, 56], strides = [1, 1]} : vector<32x224xf32> to vector<32x56xf32>
    %14 = vector.extract_strided_slice %1 {offsets = [0, 168], sizes = [32, 56], strides = [1, 1]} : vector<32x224xf32> to vector<32x56xf32>
    %15 = vector.extract_strided_slice %10 {offsets = [0, 0], sizes = [32, 4], strides = [1, 1]} : vector<32x20xf32> to vector<32x4xf32>
    %cst_6 = arith.constant dense<0xFF800000> : vector<32xf32>
    %16 = vector.multi_reduction <maximumf>, %15, %cst_6 [1] : vector<32x4xf32> to vector<32xf32>
    %17 = vector.shape_cast %16 : vector<32xf32> to vector<32x1xf32>
    %18 = vector.broadcast %17 : vector<32x1xf32> to vector<32x4xf32>
    %19 = arith.subf %15, %18 : vector<32x4xf32>
    %20 = math.exp %19 : vector<32x4xf32>
    %cst_7 = arith.constant dense<0.000000e+00> : vector<32xf32>
    %21 = vector.multi_reduction <add>, %20, %cst_7 [1] : vector<32x4xf32> to vector<32xf32>
    %22 = vector.shape_cast %21 : vector<32xf32> to vector<32x1xf32>
    %23 = tpu.reciprocal %22 {approx = true} : vector<32x1xf32> -> vector<32x1xf32>
    %24 = vector.broadcast %23 : vector<32x1xf32> to vector<32x4xf32>
    %25 = arith.mulf %20, %24 : vector<32x4xf32>
    %26 = vector.extract_strided_slice %25 {offsets = [0, 0], sizes = [32, 1], strides = [1, 1]} : vector<32x4xf32> to vector<32x1xf32>
    %27 = vector.broadcast %26 : vector<32x1xf32> to vector<32x56xf32>
    %28 = arith.mulf %27, %11 : vector<32x56xf32>
    %29 = vector.extract_strided_slice %25 {offsets = [0, 1], sizes = [32, 1], strides = [1, 1]} : vector<32x4xf32> to vector<32x1xf32>
    %30 = vector.broadcast %29 : vector<32x1xf32> to vector<32x56xf32>
    %31 = arith.mulf %30, %12 : vector<32x56xf32>
    %32 = arith.addf %28, %31 : vector<32x56xf32>
    %33 = vector.extract_strided_slice %25 {offsets = [0, 2], sizes = [32, 1], strides = [1, 1]} : vector<32x4xf32> to vector<32x1xf32>
    %34 = vector.broadcast %33 : vector<32x1xf32> to vector<32x56xf32>
    %35 = arith.mulf %34, %13 : vector<32x56xf32>
    %36 = arith.addf %32, %35 : vector<32x56xf32>
    %37 = vector.extract_strided_slice %25 {offsets = [0, 3], sizes = [32, 1], strides = [1, 1]} : vector<32x4xf32> to vector<32x1xf32>
    %38 = vector.broadcast %37 : vector<32x1xf32> to vector<32x56xf32>
    %39 = arith.mulf %38, %14 : vector<32x56xf32>
    %40 = arith.addf %36, %39 : vector<32x56xf32>
    %41 = vector.extract_strided_slice %10 {offsets = [0, 4], sizes = [32, 4], strides = [1, 1]} : vector<32x20xf32> to vector<32x4xf32>
    %cst_8 = arith.constant dense<0xFF800000> : vector<32xf32>
    %42 = vector.multi_reduction <maximumf>, %41, %cst_8 [1] : vector<32x4xf32> to vector<32xf32>
    %43 = vector.shape_cast %42 : vector<32xf32> to vector<32x1xf32>
    %44 = vector.broadcast %43 : vector<32x1xf32> to vector<32x4xf32>
    %45 = arith.subf %41, %44 : vector<32x4xf32>
    %46 = math.exp %45 : vector<32x4xf32>
    %cst_9 = arith.constant dense<0.000000e+00> : vector<32xf32>
    %47 = vector.multi_reduction <add>, %46, %cst_9 [1] : vector<32x4xf32> to vector<32xf32>
    %48 = vector.shape_cast %47 : vector<32xf32> to vector<32x1xf32>
    %49 = tpu.reciprocal %48 {approx = true} : vector<32x1xf32> -> vector<32x1xf32>
    %50 = vector.broadcast %49 : vector<32x1xf32> to vector<32x4xf32>
    %51 = arith.mulf %46, %50 : vector<32x4xf32>
    %52 = vector.extract_strided_slice %51 {offsets = [0, 0], sizes = [32, 1], strides = [1, 1]} : vector<32x4xf32> to vector<32x1xf32>
    %53 = vector.broadcast %52 : vector<32x1xf32> to vector<32x56xf32>
    %54 = arith.mulf %53, %11 : vector<32x56xf32>
    %55 = vector.extract_strided_slice %51 {offsets = [0, 1], sizes = [32, 1], strides = [1, 1]} : vector<32x4xf32> to vector<32x1xf32>
    %56 = vector.broadcast %55 : vector<32x1xf32> to vector<32x56xf32>
    %57 = arith.mulf %56, %12 : vector<32x56xf32>
    %58 = arith.addf %54, %57 : vector<32x56xf32>
    %59 = vector.extract_strided_slice %51 {offsets = [0, 2], sizes = [32, 1], strides = [1, 1]} : vector<32x4xf32> to vector<32x1xf32>
    %60 = vector.broadcast %59 : vector<32x1xf32> to vector<32x56xf32>
    %61 = arith.mulf %60, %13 : vector<32x56xf32>
    %62 = arith.addf %58, %61 : vector<32x56xf32>
    %63 = vector.extract_strided_slice %51 {offsets = [0, 3], sizes = [32, 1], strides = [1, 1]} : vector<32x4xf32> to vector<32x1xf32>
    %64 = vector.broadcast %63 : vector<32x1xf32> to vector<32x56xf32>
    %65 = arith.mulf %64, %14 : vector<32x56xf32>
    %66 = arith.addf %62, %65 : vector<32x56xf32>
    %67 = vector.extract_strided_slice %10 {offsets = [0, 8], sizes = [32, 4], strides = [1, 1]} : vector<32x20xf32> to vector<32x4xf32>
    %cst_10 = arith.constant dense<0xFF800000> : vector<32xf32>
    %68 = vector.multi_reduction <maximumf>, %67, %cst_10 [1] : vector<32x4xf32> to vector<32xf32>
    %69 = vector.shape_cast %68 : vector<32xf32> to vector<32x1xf32>
    %70 = vector.broadcast %69 : vector<32x1xf32> to vector<32x4xf32>
    %71 = arith.subf %67, %70 : vector<32x4xf32>
    %72 = math.exp %71 : vector<32x4xf32>
    %cst_11 = arith.constant dense<0.000000e+00> : vector<32xf32>
    %73 = vector.multi_reduction <add>, %72, %cst_11 [1] : vector<32x4xf32> to vector<32xf32>
    %74 = vector.shape_cast %73 : vector<32xf32> to vector<32x1xf32>
    %75 = tpu.reciprocal %74 {approx = true} : vector<32x1xf32> -> vector<32x1xf32>
    %76 = vector.broadcast %75 : vector<32x1xf32> to vector<32x4xf32>
    %77 = arith.mulf %72, %76 : vector<32x4xf32>
    %78 = vector.extract_strided_slice %77 {offsets = [0, 0], sizes = [32, 1], strides = [1, 1]} : vector<32x4xf32> to vector<32x1xf32>
    %79 = vector.broadcast %78 : vector<32x1xf32> to vector<32x56xf32>
    %80 = arith.mulf %79, %11 : vector<32x56xf32>
    %81 = vector.extract_strided_slice %77 {offsets = [0, 1], sizes = [32, 1], strides = [1, 1]} : vector<32x4xf32> to vector<32x1xf32>
    %82 = vector.broadcast %81 : vector<32x1xf32> to vector<32x56xf32>
    %83 = arith.mulf %82, %12 : vector<32x56xf32>
    %84 = arith.addf %80, %83 : vector<32x56xf32>
    %85 = vector.extract_strided_slice %77 {offsets = [0, 2], sizes = [32, 1], strides = [1, 1]} : vector<32x4xf32> to vector<32x1xf32>
    %86 = vector.broadcast %85 : vector<32x1xf32> to vector<32x56xf32>
    %87 = arith.mulf %86, %13 : vector<32x56xf32>
    %88 = arith.addf %84, %87 : vector<32x56xf32>
    %89 = vector.extract_strided_slice %77 {offsets = [0, 3], sizes = [32, 1], strides = [1, 1]} : vector<32x4xf32> to vector<32x1xf32>
    %90 = vector.broadcast %89 : vector<32x1xf32> to vector<32x56xf32>
    %91 = arith.mulf %90, %14 : vector<32x56xf32>
    %92 = arith.addf %88, %91 : vector<32x56xf32>
    %93 = vector.extract_strided_slice %10 {offsets = [0, 12], sizes = [32, 4], strides = [1, 1]} : vector<32x20xf32> to vector<32x4xf32>
    %cst_12 = arith.constant dense<0xFF800000> : vector<32xf32>
    %94 = vector.multi_reduction <maximumf>, %93, %cst_12 [1] : vector<32x4xf32> to vector<32xf32>
    %95 = vector.shape_cast %94 : vector<32xf32> to vector<32x1xf32>
    %96 = vector.broadcast %95 : vector<32x1xf32> to vector<32x4xf32>
    %97 = arith.subf %93, %96 : vector<32x4xf32>
    %98 = math.exp %97 : vector<32x4xf32>
    %cst_13 = arith.constant dense<0.000000e+00> : vector<32xf32>
    %99 = vector.multi_reduction <add>, %98, %cst_13 [1] : vector<32x4xf32> to vector<32xf32>
    %100 = vector.shape_cast %99 : vector<32xf32> to vector<32x1xf32>
    %101 = tpu.reciprocal %100 {approx = true} : vector<32x1xf32> -> vector<32x1xf32>
    %102 = vector.broadcast %101 : vector<32x1xf32> to vector<32x4xf32>
    %103 = arith.mulf %98, %102 : vector<32x4xf32>
    %104 = vector.extract_strided_slice %103 {offsets = [0, 0], sizes = [32, 1], strides = [1, 1]} : vector<32x4xf32> to vector<32x1xf32>
    %105 = vector.broadcast %104 : vector<32x1xf32> to vector<32x56xf32>
    %106 = arith.mulf %105, %11 : vector<32x56xf32>
    %107 = vector.extract_strided_slice %103 {offsets = [0, 1], sizes = [32, 1], strides = [1, 1]} : vector<32x4xf32> to vector<32x1xf32>
    %108 = vector.broadcast %107 : vector<32x1xf32> to vector<32x56xf32>
    %109 = arith.mulf %108, %12 : vector<32x56xf32>
    %110 = arith.addf %106, %109 : vector<32x56xf32>
    %111 = vector.extract_strided_slice %103 {offsets = [0, 2], sizes = [32, 1], strides = [1, 1]} : vector<32x4xf32> to vector<32x1xf32>
    %112 = vector.broadcast %111 : vector<32x1xf32> to vector<32x56xf32>
    %113 = arith.mulf %112, %13 : vector<32x56xf32>
    %114 = arith.addf %110, %113 : vector<32x56xf32>
    %115 = vector.extract_strided_slice %103 {offsets = [0, 3], sizes = [32, 1], strides = [1, 1]} : vector<32x4xf32> to vector<32x1xf32>
    %116 = vector.broadcast %115 : vector<32x1xf32> to vector<32x56xf32>
    %117 = arith.mulf %116, %14 : vector<32x56xf32>
    %118 = arith.addf %114, %117 : vector<32x56xf32>
    %119 = vector.extract_strided_slice %10 {offsets = [0, 16], sizes = [32, 4], strides = [1, 1]} : vector<32x20xf32> to vector<32x4xf32>
    %cst_14 = arith.constant dense<0xFF800000> : vector<32xf32>
    %120 = vector.multi_reduction <maximumf>, %119, %cst_14 [1] : vector<32x4xf32> to vector<32xf32>
    %121 = vector.shape_cast %120 : vector<32xf32> to vector<32x1xf32>
    %122 = vector.broadcast %121 : vector<32x1xf32> to vector<32x4xf32>
    %123 = arith.subf %119, %122 : vector<32x4xf32>
    %124 = math.exp %123 : vector<32x4xf32>
    %cst_15 = arith.constant dense<0.000000e+00> : vector<32xf32>
    %125 = vector.multi_reduction <add>, %124, %cst_15 [1] : vector<32x4xf32> to vector<32xf32>
    %126 = vector.shape_cast %125 : vector<32xf32> to vector<32x1xf32>
    %127 = tpu.reciprocal %126 {approx = true} : vector<32x1xf32> -> vector<32x1xf32>
    %128 = vector.broadcast %127 : vector<32x1xf32> to vector<32x4xf32>
    %129 = arith.mulf %124, %128 : vector<32x4xf32>
    %130 = vector.extract_strided_slice %129 {offsets = [0, 0], sizes = [32, 1], strides = [1, 1]} : vector<32x4xf32> to vector<32x1xf32>
    %131 = vector.broadcast %130 : vector<32x1xf32> to vector<32x56xf32>
    %132 = arith.mulf %131, %11 : vector<32x56xf32>
    %133 = vector.extract_strided_slice %129 {offsets = [0, 1], sizes = [32, 1], strides = [1, 1]} : vector<32x4xf32> to vector<32x1xf32>
    %134 = vector.broadcast %133 : vector<32x1xf32> to vector<32x56xf32>
    %135 = arith.mulf %134, %12 : vector<32x56xf32>
    %136 = arith.addf %132, %135 : vector<32x56xf32>
    %137 = vector.extract_strided_slice %129 {offsets = [0, 2], sizes = [32, 1], strides = [1, 1]} : vector<32x4xf32> to vector<32x1xf32>
    %138 = vector.broadcast %137 : vector<32x1xf32> to vector<32x56xf32>
    %139 = arith.mulf %138, %13 : vector<32x56xf32>
    %140 = arith.addf %136, %139 : vector<32x56xf32>
    %141 = vector.extract_strided_slice %129 {offsets = [0, 3], sizes = [32, 1], strides = [1, 1]} : vector<32x4xf32> to vector<32x1xf32>
    %142 = vector.broadcast %141 : vector<32x1xf32> to vector<32x56xf32>
    %143 = arith.mulf %142, %14 : vector<32x56xf32>
    %144 = arith.addf %140, %143 : vector<32x56xf32>
    %145 = tpu.concatenate %40, %66, %92, %118, %144 in 1 : vector<32x56xf32>, vector<32x56xf32>, vector<32x56xf32>, vector<32x56xf32>, vector<32x56xf32> -> vector<32x280xf32>
    %c0_16 = arith.constant 0 : index
    %c0_17 = arith.constant 0 : index
    %146 = vector.load %arg4[%c0_16, %c0_17] : memref<32x280xf32, #tpu.memory_space<vmem>>, vector<32x280xf32>
    tpu.vector_store %arg4[%c0_16, %c0_17], %145 {strides = array<i32>} : memref<32x280xf32, #tpu.memory_space<vmem>>, vector<32x280xf32>,
    return
  }
  func.func @transform_0(%arg0: i32) -> (i32, i32) {
    %c0_i32 = arith.constant 0 : i32
    %c0_i32_0 = arith.constant 0 : i32
    return %arg0, %c0_i32 : i32, i32
  }
  func.func @transform_1(%arg0: i32) -> (i32, i32) {
    %c0_i32 = arith.constant 0 : i32
    %c0_i32_0 = arith.constant 0 : i32
    %c0_i32_1 = arith.constant 0 : i32
    return %c0_i32, %c0_i32_0 : i32, i32
  }
  func.func @transform_2(%arg0: i32) -> (i32, i32) {
    %c0_i32 = arith.constant 0 : i32
    %c0_i32_0 = arith.constant 0 : i32
    %c0_i32_1 = arith.constant 0 : i32
    return %c0_i32, %c0_i32_0 : i32, i32
  }
  func.func @transform_3(%arg0: i32) -> (i32, i32) {
    %c0_i32 = arith.constant 0 : i32
    %c0_i32_0 = arith.constant 0 : i32
    return %arg0, %c0_i32 : i32, i32
  }
}

</mosaic_0001>

<llo_original>
// kernel: self_attention_pallas.1
$region0: #{self_attention_pallas.1}
  #allocation0 [shape = 'u32[]', space=smem, size = 0x4, offset = 0x4, fixed_abs, tag = 'smem constant byte address 0x4 - core index']
  #allocation1 [shape = 'u32[72,128]{1,0:T(1,128)}', space=vmem, size = 0x9000, scoped, tag = 'internal scratch']
  %s0 = inlined_call_operand.vmem [shape: bf16[64,224], index: 0, kind: input, shape index: {}]
  %s1 = inlined_call_operand.vmem [shape: bf16[224,448], index: 1, kind: input, shape index: {}]
  %s2 = inlined_call_operand.vmem [shape: bf16[320,20], index: 2, kind: input, shape index: {}]
  %s3 = inlined_call_operand.hbm [shape: f32[64,280], index: 3, kind: output, shape index: {}]
  %s4 = sld [smem:[#allocation0]]
  $region45: #{self_attention_pallas.1} parent=0
    _
  %s6 = ssub.s32 1, %s4
  %s7 = scalar_select 0, %s6, %s4
  $region1: #{self_attention_pallas.1} parent=0
    #allocation2 [shape = 'u8[98304]{0}', space=vmem, size = 0x18000, scoped, tag = 'output window, operand 0']
    #allocation3 [shape = 's32[2]{0}', space=sflag, size = 0x8, scoped, tag = 'scoped memory for self_attention_pallas.1']
    %8 = vsyncpa [#allocation3], 0
    %s9 = scalar_lea.sflag [#allocation3], 1
    %10 = vsyncpa %s9, 0
    loop: start=0, step=1, limit=4
    $region2: #{self_attention_pallas.1} parent=1 // loop_pre_header
      _
    $region3: #{self_attention_pallas.1} parent=1 // loop_header
      %s12 = sphi 0, %s16
      %p13 = scmp.ge.s32.totalorder %s12, 4
      %s22 = sphi 0, %s24
      %s25 = sphi 0, %s22
      %s26 = sphi 0, %s25
      %s42 = sphi 0, %s26
      %s46 = sphi 0, %s46
      %s48 = sphi 0, %s46
      %s49 = sphi 0, %s48
      %s63 = sphi 0, %s49
      %s67 = sphi 0, %s67
      %s69 = sphi 0, %s67
      %s70 = sphi 0, %s69
      %s84 = sphi 0, %s70
      %s90 = sphi 0, %s92
      %s93 = sphi 0, %s90
      %s94 = sphi 0, %s93
      %s110 = sphi 0, %s94
    $region4: #{self_attention_pallas.1} parent=1 // loop_header_branch
      %15 = sbr.rel (%p13) target = $region8
    $region5: #{self_attention_pallas.1} parent=1 // loop_body
      %s17 = ssub.s32 %s12, 1
      %s18 = ssub.s32 %s12, 2
      %s19 = sadd.s32 %s12, 1
      %s20 = ssub.s32 %s12, %s19
      %p21 = scmp.eq.s32.totalorder %s20, 0
      %s23 = sadd.s32 %s22, 1
      %s24 = scalar_select %p21, %s22, %s23
      %p27 = pneg %p21
      %p28 = scmp.eq.s32.totalorder %s12, 1
      %p29 = por %p27, %p28
      %p30 = scmp.ne.s32.totalorder %s22, %s25
      %p31 = scmp.eq.s32.totalorder %s12, 0
      %p32 = por %p30, %p31
      %p33 = scmp.ne.s32.totalorder %s22, %s25
      %p34 = scmp.eq.s32.totalorder %s17, 1
      %p35 = por %p33, %p34
      %p36 = scmp.ne.s32.totalorder %s25, %s26
      %p37 = scmp.eq.s32.totalorder %s17, 0
      %p38 = por %p36, %p37
      %p39 = scmp.ne.s32.totalorder %s25, %s26
      %p40 = scmp.eq.s32.totalorder %s18, 1
      %p41 = por %p39, %p40
      %p43 = scmp.ne.s32.totalorder %s26, %s42
      %p44 = scmp.eq.s32.totalorder %s18, 0
      %p45 = por %p43, %p44
      %s47 = sadd.s32 %s46, 1
      %p50 = scmp.eq.s32.totalorder %s12, 1
      %p51 = scmp.ne.s32.totalorder %s46, %s48
      %p52 = scmp.eq.s32.totalorder %s12, 0
      %p53 = por %p51, %p52
      %p54 = scmp.ne.s32.totalorder %s46, %s48
      %p55 = scmp.eq.s32.totalorder %s17, 1
      %p56 = por %p54, %p55
      %p57 = scmp.ne.s32.totalorder %s48, %s49
      %p58 = scmp.eq.s32.totalorder %s17, 0
      %p59 = por %p57, %p58
      %p60 = scmp.ne.s32.totalorder %s48, %s49
      %p61 = scmp.eq.s32.totalorder %s18, 1
      %p62 = por %p60, %p61
      %p64 = scmp.ne.s32.totalorder %s49, %s63
      %p65 = scmp.eq.s32.totalorder %s18, 0
      %p66 = por %p64, %p65
      %s68 = sadd.s32 %s67, 1
      %p71 = scmp.eq.s32.totalorder %s12, 1
      %p72 = scmp.ne.s32.totalorder %s67, %s69
      %p73 = scmp.eq.s32.totalorder %s12, 0
      %p74 = por %p72, %p73
      %p75 = scmp.ne.s32.totalorder %s67, %s69
      %p76 = scmp.eq.s32.totalorder %s17, 1
      %p77 = por %p75, %p76
      %p78 = scmp.ne.s32.totalorder %s69, %s70
      %p79 = scmp.eq.s32.totalorder %s17, 0
      %p80 = por %p78, %p79
      %p81 = scmp.ne.s32.totalorder %s69, %s70
      %p82 = scmp.eq.s32.totalorder %s18, 1
      %p83 = por %p81, %p82
      %p85 = scmp.ne.s32.totalorder %s70, %s84
      %p86 = scmp.eq.s32.totalorder %s18, 0
      %p87 = por %p85, %p86
      %s88 = ssub.s32 %s12, %s19
      %p89 = scmp.eq.s32.totalorder %s88, 0
      %s91 = sadd.s32 %s90, 1
      %s92 = scalar_select %p89, %s90, %s91
      %p95 = pneg %p89
      %p96 = scmp.eq.s32.totalorder %s12, 1
      %p97 = por %p95, %p96
      %p98 = scmp.ne.s32.totalorder %s90, %s93
      %p99 = scmp.eq.s32.totalorder %s12, 0
      %p100 = por %p98, %p99
      %p101 = scmp.ne.s32.totalorder %s90, %s93
      %p102 = scmp.eq.s32.totalorder %s17, 1
      %p103 = por %p101, %p102
      %p104 = scmp.ne.s32.totalorder %s93, %s94
      %p105 = scmp.eq.s32.totalorder %s17, 0
      %p106 = por %p104, %p105
      %p107 = scmp.ne.s32.totalorder %s93, %s94
      %p108 = scmp.eq.s32.totalorder %s18, 1
      %p109 = por %p107, %p108
      %p111 = scmp.ne.s32.totalorder %s94, %s110
      %p112 = scmp.eq.s32.totalorder %s18, 0
      %p113 = por %p111, %p112
      %p114 = scmp.le.s32.totalorder 1, %s12
      %p115 = scmp.lt.s32.totalorder %s12, 3
      %p116 = pnand %p114, %p115
      %p117 = pneg %p116
      // Predicated region
      $region9: #{self_attention_pallas.1} parent=5 // pred_check
        _
      $region10: #{self_attention_pallas.1} parent=5 // pred_check_branch
        %119 = sbr.rel (%p116) target = $region12
      $region11: #{self_attention_pallas.1} parent=5 // pred_region
        %s120 = ssub.s32 %s12, 1
        // Predicated region
        $region13: #{self_attention_pallas.1} parent=11 // pred_check
          %p121 = pneg %p59
        $region14: #{self_attention_pallas.1} parent=11 // pred_check_branch
          %123 = sbr.rel (%p121) target = $region16
        $region15: #{self_attention_pallas.1} parent=11 // pred_region
          _
        $region16: #{self_attention_pallas.1} parent=11 // pred_fallthru
          _
        // Predicated region
        $region17: #{self_attention_pallas.1} parent=11 // pred_check
          %p124 = pneg %p80
        $region18: #{self_attention_pallas.1} parent=11 // pred_check_branch
          %126 = sbr.rel (%p124) target = $region20
        $region19: #{self_attention_pallas.1} parent=11 // pred_region
          _
        $region20: #{self_attention_pallas.1} parent=11 // pred_fallthru
          _
      $region12: #{self_attention_pallas.1} parent=5 // pred_fallthru
        _
      %p127 = scmp.lt.s32.totalorder %s12, 2
      // Predicated region
      $region21: #{self_attention_pallas.1} parent=5 // pred_check
        %p128 = pneg %p127
      $region22: #{self_attention_pallas.1} parent=5 // pred_check_branch
        %130 = sbr.rel (%p128) target = $region24
      $region23: #{self_attention_pallas.1} parent=5 // pred_region
        // Predicated region
        $region25: #{self_attention_pallas.1} parent=23 // pred_check
          %p131 = pneg %p32
        $region26: #{self_attention_pallas.1} parent=23 // pred_check_branch
          %133 = sbr.rel (%p131) target = $region28
        $region27: #{self_attention_pallas.1} parent=23 // pred_region
          %s134 = smul.u32 4, %s12
          %p135 = scmp.lt.s32.totalorder %s134, 7
          %s136 = scalar_select %p135, %s134, 7
          %s137 = smul.addr %s136, 2
          %s138 = smul.addr %s137, 4
          %s139 = scalar_lea.vmem %s0, %s138
          %s140 = smul.u32 4, %s12
        $region28: #{self_attention_pallas.1} parent=23 // pred_fallthru
          _
      $region24: #{self_attention_pallas.1} parent=5 // pred_fallthru
        _
      %p141 = scmp.le.s32.totalorder 1, %s12
      %p142 = scmp.lt.s32.totalorder %s12, 3
      %p143 = pnand %p141, %p142
      %p144 = pneg %p143
      // Predicated region
      $region29: #{self_attention_pallas.1} parent=5 // pred_check
        _
      $region30: #{self_attention_pallas.1} parent=5 // pred_check_branch
        %146 = sbr.rel (%p143) target = $region32
      $region31: #{self_attention_pallas.1} parent=5 // pred_region
        %s147 = ssub.s32 %s12, 1
        %s148 = smul.u32 4, %s17
        %p149 = scmp.lt.s32.totalorder %s148, 7
        %s150 = scalar_select %p149, %s148, 7
        %s151 = smul.addr %s150, 2
        %s152 = smul.addr %s151, 4
        %s153 = scalar_lea.vmem %s0, %s152
        %p154 = pneg %p38
        %p155 = pneg %p35
        %p156 = pneg %p59
        %p157 = pneg %p56
        %p158 = pneg %p80
        %p159 = pneg %p77
        %p160 = pneg %p106
        %p161 = pneg %p103
        %s162 = sand.u32 %s93, 1
        %s163 = scalar_lea.sflag [#allocation3], %s162
        %s164 = sand.u32 %s93, 1
        %s165 = smul.addr %s164, 96
        %s166 = scalar_lea.vmem [#allocation2], %s165
        %s167 = smul.u32 4, %s17
        %p168 = scmp.lt.s32.totalorder %s167, 7
        %s169 = scalar_select %p168, %s167, 7
        %s170 = smul.addr %s169, 2
        %s171 = smul.addr %s170, 4
        %s172 = scalar_lea.vmem %s0, %s171
        %s173 = smul.u32 4, %s17
        %s174 = smul.u32 4, %s17
        %v176 = vld [vmem:[%s172] sm:$0xff]
        %v177 = vld [vmem:[%s172 + $0x8] sm:$0xff]
        %v178 = vld [vmem:[%s172 + $0x10] sm:$0xff]
        %v179 = vld [vmem:[%s172 + $0x18] sm:$0xff]
        %v180 = vunpack.c.l.bf16 %v176
        %v181 = vunpack.c.h.bf16 %v176
        %v182 = vunpack.c.l.bf16 %v177
        %v183 = vunpack.c.h.bf16 %v177
        %v184 = vunpack.c.l.bf16 %v178
        %v185 = vunpack.c.h.bf16 %v178
        %v186 = vunpack.c.l.bf16 %v179
        %v187 = vunpack.c.h.bf16 %v179
        %v188 = vld [vmem:[%s1] sm:$0xff]
        %v189 = vld [vmem:[%s1 + $0x8] sm:$0xff]
        %v190 = vld [vmem:[%s1 + $0x10] sm:$0xff]
        %v191 = vld [vmem:[%s1 + $0x18] sm:$0xff]
        %v192 = vld [vmem:[%s1 + $0x20] sm:$0xff]
        %v193 = vld [vmem:[%s1 + $0x28] sm:$0xff]
        %v194 = vld [vmem:[%s1 + $0x30] sm:$0xff]
        %v195 = vld [vmem:[%s1 + $0x38] sm:$0xff]
        %v196 = vld [vmem:[%s1 + $0x40] sm:$0xff]
        %v197 = vld [vmem:[%s1 + $0x48] sm:$0xff]
        %v198 = vld [vmem:[%s1 + $0x50] sm:$0xff]
        %v199 = vld [vmem:[%s1 + $0x58] sm:$0xff]
        %v200 = vld [vmem:[%s1 + $0x60] sm:$0xff]
        %v201 = vld [vmem:[%s1 + $0x68] sm:$0xff]
        %v202 = vld [vmem:[%s1 + $0x70] sm:$0xff]
        %v203 = vld [vmem:[%s1 + $0x78] sm:$0xff]
        %v204 = vld [vmem:[%s1 + $0x80] sm:$0xff]
        %v205 = vld [vmem:[%s1 + $0x88] sm:$0xff]
        %v206 = vld [vmem:[%s1 + $0x90] sm:$0xff]
        %v207 = vld [vmem:[%s1 + $0x98] sm:$0xff]
        %v208 = vld [vmem:[%s1 + $0xa0] sm:$0xff]
        %v209 = vld [vmem:[%s1 + $0xa8] sm:$0xff]
        %v210 = vld [vmem:[%s1 + $0xb0] sm:$0xff]
        %v211 = vld [vmem:[%s1 + $0xb8] sm:$0xff]
        %v212 = vld [vmem:[%s1 + $0xc0] sm:$0xff]
        %v213 = vld [vmem:[%s1 + $0xc8] sm:$0xff]
        %v214 = vld [vmem:[%s1 + $0xd0] sm:$0xff]
        %v215 = vld [vmem:[%s1 + $0xd8] sm:$0xff]
        %v216 = vld [vmem:[%s1 + $0xe0] sm:$0xff]
        %v217 = vld [vmem:[%s1 + $0xe8] sm:$0xff]
        %v218 = vld [vmem:[%s1 + $0xf0] sm:$0xff]
        %v219 = vld [vmem:[%s1 + $0xf8] sm:$0xff]
        %v220 = vld [vmem:[%s1 + $0x100] sm:$0xff]
        %v221 = vld [vmem:[%s1 + $0x108] sm:$0xff]
        %v222 = vld [vmem:[%s1 + $0x110] sm:$0xff]
        %v223 = vld [vmem:[%s1 + $0x118] sm:$0xff]
        %v224 = vld [vmem:[%s1 + $0x120] sm:$0xff]
        %v225 = vld [vmem:[%s1 + $0x128] sm:$0xff]
        %v226 = vld [vmem:[%s1 + $0x130] sm:$0xff]
        %v227 = vld [vmem:[%s1 + $0x138] sm:$0xff]
        %v228 = vld [vmem:[%s1 + $0x140] sm:$0xff]
        %v229 = vld [vmem:[%s1 + $0x148] sm:$0xff]
        %v230 = vld [vmem:[%s1 + $0x150] sm:$0xff]
        %v231 = vld [vmem:[%s1 + $0x158] sm:$0xff]
        %v232 = vld [vmem:[%s1 + $0x160] sm:$0xff]
        %v233 = vld [vmem:[%s1 + $0x168] sm:$0xff]
        %v234 = vld [vmem:[%s1 + $0x170] sm:$0xff]
        %v235 = vld [vmem:[%s1 + $0x178] sm:$0xff]
        %v236 = vld [vmem:[%s1 + $0x180] sm:$0xff]
        %v237 = vld [vmem:[%s1 + $0x188] sm:$0xff]
        %v238 = vld [vmem:[%s1 + $0x190] sm:$0xff]
        %v239 = vld [vmem:[%s1 + $0x198] sm:$0xff]
        %v240 = vld [vmem:[%s1 + $0x1a0] sm:$0xff]
        %v241 = vld [vmem:[%s1 + $0x1a8] sm:$0xff]
        %v242 = vld [vmem:[%s1 + $0x1b0] sm:$0xff]
        %v243 = vld [vmem:[%s1 + $0x1b8] sm:$0xff]
        %v248 = vunpack.c.l.b16 %v176
        %v249 = vunpack.c.h.b16 %v176
        %v250 = vunpack.c.l.b16 %v177
        %v251 = vunpack.c.h.b16 %v177
        %v252 = vunpack.c.l.b16 %v178
        %v253 = vunpack.c.h.b16 %v178
        %v254 = vunpack.c.l.b16 %v179
        %v255 = vunpack.c.h.b16 %v179
        %v256 = vpack.c.b16 %v250, %v248
        %v257 = vpack.c.b16 %v251, %v249
        %v258 = vpack.c.b16 %v254, %v252
        %v259 = vpack.c.b16 %v255, %v253
        %v318 = vunpack.c.l.b16 %v188
        %v319 = vunpack.c.h.b16 %v188
        %v320 = vunpack.c.l.b16 %v189
        %v321 = vunpack.c.h.b16 %v189
        %v322 = vunpack.c.l.b16 %v190
        %v323 = vunpack.c.h.b16 %v190
        %v324 = vunpack.c.l.b16 %v191
        %v325 = vunpack.c.h.b16 %v191
        %v326 = vunpack.c.l.b16 %v192
        %v327 = vunpack.c.h.b16 %v192
        %v328 = vunpack.c.l.b16 %v193
        %v329 = vunpack.c.h.b16 %v193
        %v330 = vunpack.c.l.b16 %v194
        %v331 = vunpack.c.h.b16 %v194
        %v332 = vunpack.c.l.b16 %v195
        %v333 = vunpack.c.h.b16 %v195
        %v334 = vunpack.c.l.b16 %v196
        %v335 = vunpack.c.h.b16 %v196
        %v336 = vunpack.c.l.b16 %v197
        %v337 = vunpack.c.h.b16 %v197
        %v338 = vunpack.c.l.b16 %v198
        %v339 = vunpack.c.h.b16 %v198
        %v340 = vunpack.c.l.b16 %v199
        %v341 = vunpack.c.h.b16 %v199
        %v342 = vunpack.c.l.b16 %v200
        %v343 = vunpack.c.h.b16 %v200
        %v344 = vunpack.c.l.b16 %v201
        %v345 = vunpack.c.h.b16 %v201
        %v346 = vunpack.c.l.b16 %v202
        %v347 = vunpack.c.h.b16 %v202
        %v348 = vunpack.c.l.b16 %v203
        %v349 = vunpack.c.h.b16 %v203
        %v350 = vunpack.c.l.b16 %v204
        %v351 = vunpack.c.h.b16 %v204
        %v352 = vunpack.c.l.b16 %v205
        %v353 = vunpack.c.h.b16 %v205
        %v354 = vunpack.c.l.b16 %v206
        %v355 = vunpack.c.h.b16 %v206
        %v356 = vunpack.c.l.b16 %v207
        %v357 = vunpack.c.h.b16 %v207
        %v358 = vunpack.c.l.b16 %v208
        %v359 = vunpack.c.h.b16 %v208
        %v360 = vunpack.c.l.b16 %v209
        %v361 = vunpack.c.h.b16 %v209
        %v362 = vunpack.c.l.b16 %v210
        %v363 = vunpack.c.h.b16 %v210
        %v364 = vunpack.c.l.b16 %v211
        %v365 = vunpack.c.h.b16 %v211
        %v366 = vunpack.c.l.b16 %v212
        %v367 = vunpack.c.h.b16 %v212
        %v368 = vunpack.c.l.b16 %v213
        %v369 = vunpack.c.h.b16 %v213
        %v370 = vunpack.c.l.b16 %v214
        %v371 = vunpack.c.h.b16 %v214
        %v372 = vunpack.c.l.b16 %v215
        %v373 = vunpack.c.h.b16 %v215
        %v374 = vunpack.c.l.b16 %v216
        %v375 = vunpack.c.h.b16 %v216
        %v376 = vunpack.c.l.b16 %v217
        %v377 = vunpack.c.h.b16 %v217
        %v378 = vunpack.c.l.b16 %v218
        %v379 = vunpack.c.h.b16 %v218
        %v380 = vunpack.c.l.b16 %v219
        %v381 = vunpack.c.h.b16 %v219
        %v382 = vunpack.c.l.b16 %v220
        %v383 = vunpack.c.h.b16 %v220
        %v384 = vunpack.c.l.b16 %v221
        %v385 = vunpack.c.h.b16 %v221
        %v386 = vunpack.c.l.b16 %v222
        %v387 = vunpack.c.h.b16 %v222
        %v388 = vunpack.c.l.b16 %v223
        %v389 = vunpack.c.h.b16 %v223
        %v390 = vunpack.c.l.b16 %v224
        %v391 = vunpack.c.h.b16 %v224
        %v392 = vunpack.c.l.b16 %v225
        %v393 = vunpack.c.h.b16 %v225
        %v394 = vunpack.c.l.b16 %v226
        %v395 = vunpack.c.h.b16 %v226
        %v396 = vunpack.c.l.b16 %v227
        %v397 = vunpack.c.h.b16 %v227
        %v398 = vunpack.c.l.b16 %v228
        %v399 = vunpack.c.h.b16 %v228
        %v400 = vunpack.c.l.b16 %v229
        %v401 = vunpack.c.h.b16 %v229
        %v402 = vunpack.c.l.b16 %v230
        %v403 = vunpack.c.h.b16 %v230
        %v404 = vunpack.c.l.b16 %v231
        %v405 = vunpack.c.h.b16 %v231
        %v406 = vunpack.c.l.b16 %v232
        %v407 = vunpack.c.h.b16 %v232
        %v408 = vunpack.c.l.b16 %v233
        %v409 = vunpack.c.h.b16 %v233
        %v410 = vunpack.c.l.b16 %v234
        %v411 = vunpack.c.h.b16 %v234
        %v412 = vunpack.c.l.b16 %v235
        %v413 = vunpack.c.h.b16 %v235
        %v414 = vunpack.c.l.b16 %v236
        %v415 = vunpack.c.h.b16 %v236
        %v416 = vunpack.c.l.b16 %v237
        %v417 = vunpack.c.h.b16 %v237
        %v418 = vunpack.c.l.b16 %v238
        %v419 = vunpack.c.h.b16 %v238
        %v420 = vunpack.c.l.b16 %v239
        %v421 = vunpack.c.h.b16 %v239
        %v422 = vunpack.c.l.b16 %v240
        %v423 = vunpack.c.h.b16 %v240
        %v424 = vunpack.c.l.b16 %v241
        %v425 = vunpack.c.h.b16 %v241
        %v426 = vunpack.c.l.b16 %v242
        %v427 = vunpack.c.h.b16 %v242
        %v428 = vunpack.c.l.b16 %v243
        %v429 = vunpack.c.h.b16 %v243
        %v430 = vpack.c.b16 %v322, %v318
        %v431 = vpack.c.b16 %v323, %v319
        %v432 = vpack.c.b16 %v324, %v320
        %v433 = vpack.c.b16 %v325, %v321
        %v434 = vpack.c.b16 %v330, %v326
        %v435 = vpack.c.b16 %v331, %v327
        %v436 = vpack.c.b16 %v332, %v328
        %v437 = vpack.c.b16 %v333, %v329
        %v438 = vpack.c.b16 %v338, %v334
        %v439 = vpack.c.b16 %v339, %v335
        %v440 = vpack.c.b16 %v340, %v336
        %v441 = vpack.c.b16 %v341, %v337
        %v442 = vpack.c.b16 %v346, %v342
        %v443 = vpack.c.b16 %v347, %v343
        %v444 = vpack.c.b16 %v348, %v344
        %v445 = vpack.c.b16 %v349, %v345
        %v446 = vpack.c.b16 %v354, %v350
        %v447 = vpack.c.b16 %v355, %v351
        %v448 = vpack.c.b16 %v356, %v352
        %v449 = vpack.c.b16 %v357, %v353
        %v450 = vpack.c.b16 %v362, %v358
        %v451 = vpack.c.b16 %v363, %v359
        %v452 = vpack.c.b16 %v364, %v360
        %v453 = vpack.c.b16 %v365, %v361
        %v454 = vpack.c.b16 %v370, %v366
        %v455 = vpack.c.b16 %v371, %v367
        %v456 = vpack.c.b16 %v372, %v368
        %v457 = vpack.c.b16 %v373, %v369
        %v458 = vpack.c.b16 %v378, %v374
        %v459 = vpack.c.b16 %v379, %v375
        %v460 = vpack.c.b16 %v380, %v376
        %v461 = vpack.c.b16 %v381, %v377
        %v462 = vpack.c.b16 %v386, %v382
        %v463 = vpack.c.b16 %v387, %v383
        %v464 = vpack.c.b16 %v388, %v384
        %v465 = vpack.c.b16 %v389, %v385
        %v466 = vpack.c.b16 %v394, %v390
        %v467 = vpack.c.b16 %v395, %v391
        %v468 = vpack.c.b16 %v396, %v392
        %v469 = vpack.c.b16 %v397, %v393
        %v470 = vpack.c.b16 %v402, %v398
        %v471 = vpack.c.b16 %v403, %v399
        %v472 = vpack.c.b16 %v404, %v400
        %v473 = vpack.c.b16 %v405, %v401
        %v474 = vpack.c.b16 %v410, %v406
        %v475 = vpack.c.b16 %v411, %v407
        %v476 = vpack.c.b16 %v412, %v408
        %v477 = vpack.c.b16 %v413, %v409
        %v478 = vpack.c.b16 %v418, %v414
        %v479 = vpack.c.b16 %v419, %v415
        %v480 = vpack.c.b16 %v420, %v416
        %v481 = vpack.c.b16 %v421, %v417
        %v482 = vpack.c.b16 %v426, %v422
        %v483 = vpack.c.b16 %v427, %v423
        %v484 = vpack.c.b16 %v428, %v424
        %v485 = vpack.c.b16 %v429, %v425
        %vm542 = vcmask 785408
        %v544 = vsel %vm542, %v257, 0
        %v547 = vsel %vm542, %v259, 0
        %549 = vmatpush.bf16.msra.mxu0 %v458
        %550 = vmatpush.bf16.msra.mxu0 %v454
        %551 = vmatpush.bf16.msra.mxu0 %v450
        %552 = vmatpush.bf16.msra.mxu0 %v446
        %553 = vmatpush.bf16.msra.mxu0 %v442
        %554 = vmatpush.bf16.msra.mxu0 %v438
        %555 = vmatpush.bf16.msra.mxu0 %v434
        %556 = vmatpush.bf16.msra.mxu0 %v430
        %557 = vmatmul.bf16.gmra.mxu0 %v256
        %v558 = vpop.f32.mrf.mxu0
        %v559 = vadd.f32 0.0, %v558
        %v560 = vpop.f32.mrf.mxu0
        %v561 = vadd.f32 0.0, %v560
        %562 = vmatmul.bf16.gmra.mxu0 %v258
        %v563 = vpop.f32.mrf.mxu0
        %v564 = vadd.f32 0.0, %v563
        %v565 = vpop.f32.mrf.mxu0
        %v566 = vadd.f32 0.0, %v565
        %567 = vdwg.mxu0
        %568 = vmatpush.bf16.msra.mxu0 0
        %569 = vmatpush.bf16.msra.mxu0 0
        %570 = vmatpush.bf16.msra.mxu0 %v482
        %571 = vmatpush.bf16.msra.mxu0 %v478
        %572 = vmatpush.bf16.msra.mxu0 %v474
        %573 = vmatpush.bf16.msra.mxu0 %v470
        %574 = vmatpush.bf16.msra.mxu0 %v466
        %575 = vmatpush.bf16.msra.mxu0 %v462
        %576 = vmatmul.bf16.gmra.mxu0 %v544
        %v577 = vpop.f32.mrf.mxu0
        %v578 = vadd.f32 %v559, %v577
        %v579 = vpop.f32.mrf.mxu0
        %v580 = vadd.f32 %v561, %v579
        %581 = vmatmul.bf16.gmra.mxu0 %v547
        %v582 = vpop.f32.mrf.mxu0
        %v583 = vadd.f32 %v564, %v582
        %v584 = vpop.f32.mrf.mxu0
        %v585 = vadd.f32 %v566, %v584
        %586 = vdwg.mxu0
        %587 = vmatpush.bf16.msra.mxu0 %v459
        %588 = vmatpush.bf16.msra.mxu0 %v455
        %589 = vmatpush.bf16.msra.mxu0 %v451
        %590 = vmatpush.bf16.msra.mxu0 %v447
        %591 = vmatpush.bf16.msra.mxu0 %v443
        %592 = vmatpush.bf16.msra.mxu0 %v439
        %593 = vmatpush.bf16.msra.mxu0 %v435
        %594 = vmatpush.bf16.msra.mxu0 %v431
        %595 = vmatmul.bf16.gmra.mxu0 %v256
        %v596 = vpop.f32.mrf.mxu0
        %v597 = vadd.f32 0.0, %v596
        %v598 = vpop.f32.mrf.mxu0
        %v599 = vadd.f32 0.0, %v598
        %600 = vmatmul.bf16.gmra.mxu0 %v258
        %v601 = vpop.f32.mrf.mxu0
        %v602 = vadd.f32 0.0, %v601
        %v603 = vpop.f32.mrf.mxu0
        %v604 = vadd.f32 0.0, %v603
        %605 = vdwg.mxu0
        %606 = vmatpush.bf16.msra.mxu0 0
        %607 = vmatpush.bf16.msra.mxu0 0
        %608 = vmatpush.bf16.msra.mxu0 %v483
        %609 = vmatpush.bf16.msra.mxu0 %v479
        %610 = vmatpush.bf16.msra.mxu0 %v475
        %611 = vmatpush.bf16.msra.mxu0 %v471
        %612 = vmatpush.bf16.msra.mxu0 %v467
        %613 = vmatpush.bf16.msra.mxu0 %v463
        %614 = vmatmul.bf16.gmra.mxu0 %v544
        %v615 = vpop.f32.mrf.mxu0
        %v616 = vadd.f32 %v597, %v615
        %v617 = vpop.f32.mrf.mxu0
        %v618 = vadd.f32 %v599, %v617
        %619 = vmatmul.bf16.gmra.mxu0 %v547
        %v620 = vpop.f32.mrf.mxu0
        %v621 = vadd.f32 %v602, %v620
        %v622 = vpop.f32.mrf.mxu0
        %v623 = vadd.f32 %v604, %v622
        %624 = vdwg.mxu0
        %625 = vmatpush.bf16.msra.mxu0 %v460
        %626 = vmatpush.bf16.msra.mxu0 %v456
        %627 = vmatpush.bf16.msra.mxu0 %v452
        %628 = vmatpush.bf16.msra.mxu0 %v448
        %629 = vmatpush.bf16.msra.mxu0 %v444
        %630 = vmatpush.bf16.msra.mxu0 %v440
        %631 = vmatpush.bf16.msra.mxu0 %v436
        %632 = vmatpush.bf16.msra.mxu0 %v432
        %633 = vmatmul.bf16.gmra.mxu0 %v256
        %v634 = vpop.f32.mrf.mxu0
        %v635 = vadd.f32 0.0, %v634
        %v636 = vpop.f32.mrf.mxu0
        %v637 = vadd.f32 0.0, %v636
        %638 = vmatmul.bf16.gmra.mxu0 %v258
        %v639 = vpop.f32.mrf.mxu0
        %v640 = vadd.f32 0.0, %v639
        %v641 = vpop.f32.mrf.mxu0
        %v642 = vadd.f32 0.0, %v641
        %643 = vdwg.mxu0
        %644 = vmatpush.bf16.msra.mxu0 0
        %645 = vmatpush.bf16.msra.mxu0 0
        %646 = vmatpush.bf16.msra.mxu0 %v484
        %647 = vmatpush.bf16.msra.mxu0 %v480
        %648 = vmatpush.bf16.msra.mxu0 %v476
        %649 = vmatpush.bf16.msra.mxu0 %v472
        %650 = vmatpush.bf16.msra.mxu0 %v468
        %651 = vmatpush.bf16.msra.mxu0 %v464
        %652 = vmatmul.bf16.gmra.mxu0 %v544
        %v653 = vpop.f32.mrf.mxu0
        %v654 = vadd.f32 %v635, %v653
        %v655 = vpop.f32.mrf.mxu0
        %v656 = vadd.f32 %v637, %v655
        %657 = vmatmul.bf16.gmra.mxu0 %v547
        %v658 = vpop.f32.mrf.mxu0
        %v659 = vadd.f32 %v640, %v658
        %v660 = vpop.f32.mrf.mxu0
        %v661 = vadd.f32 %v642, %v660
        %662 = vdwg.mxu0
        %663 = vmatpush.bf16.msra.mxu0 %v461
        %664 = vmatpush.bf16.msra.mxu0 %v457
        %665 = vmatpush.bf16.msra.mxu0 %v453
        %666 = vmatpush.bf16.msra.mxu0 %v449
        %667 = vmatpush.bf16.msra.mxu0 %v445
        %668 = vmatpush.bf16.msra.mxu0 %v441
        %669 = vmatpush.bf16.msra.mxu0 %v437
        %670 = vmatpush.bf16.msra.mxu0 %v433
        %671 = vmatmul.bf16.gmra.mxu0 %v256
        %v672 = vpop.f32.mrf.mxu0
        %v673 = vadd.f32 0.0, %v672
        %v674 = vpop.f32.mrf.mxu0
        %v675 = vadd.f32 0.0, %v674
        %676 = vmatmul.bf16.gmra.mxu0 %v258
        %v677 = vpop.f32.mrf.mxu0
        %v678 = vadd.f32 0.0, %v677
        %v679 = vpop.f32.mrf.mxu0
        %v680 = vadd.f32 0.0, %v679
        %681 = vdwg.mxu0
        %682 = vmatpush.bf16.msra.mxu0 0
        %683 = vmatpush.bf16.msra.mxu0 0
        %684 = vmatpush.bf16.msra.mxu0 %v485
        %685 = vmatpush.bf16.msra.mxu0 %v481
        %686 = vmatpush.bf16.msra.mxu0 %v477
        %687 = vmatpush.bf16.msra.mxu0 %v473
        %688 = vmatpush.bf16.msra.mxu0 %v469
        %689 = vmatpush.bf16.msra.mxu0 %v465
        %690 = vmatmul.bf16.gmra.mxu0 %v544
        %v691 = vpop.f32.mrf.mxu0
        %v692 = vadd.f32 %v673, %v691
        %v693 = vpop.f32.mrf.mxu0
        %v694 = vadd.f32 %v675, %v693
        %695 = vmatmul.bf16.gmra.mxu0 %v547
        %v696 = vpop.f32.mrf.mxu0
        %v697 = vadd.f32 %v678, %v696
        %v698 = vpop.f32.mrf.mxu0
        %v699 = vadd.f32 %v680, %v698
        %700 = vdwg.mxu0
        %705 = vrot.lane.b32.xlu0 %v578, 80
        %v706 = vpop.permute.xlu0 %705
        %707 = vrot.lane.b32.xlu0 %v580, 80
        %v708 = vpop.permute.xlu0 %707
        %709 = vrot.lane.b32.xlu0 %v583, 80
        %v710 = vpop.permute.xlu0 %709
        %711 = vrot.lane.b32.xlu0 %v585, 80
        %v712 = vpop.permute.xlu0 %711
        %717 = vrot.lane.b32.xlu0 %v578, 32
        %v718 = vpop.permute.xlu0 %717
        %719 = vrot.lane.b32.xlu0 %v580, 32
        %v720 = vpop.permute.xlu0 %719
        %721 = vrot.lane.b32.xlu0 %v583, 32
        %v722 = vpop.permute.xlu0 %721
        %723 = vrot.lane.b32.xlu0 %v585, 32
        %v724 = vpop.permute.xlu0 %723
        %729 = vrot.lane.b32.xlu0 %v578, 112
        %v730 = vpop.permute.xlu0 %729
        %731 = vrot.lane.b32.xlu0 %v580, 112
        %v732 = vpop.permute.xlu0 %731
        %733 = vrot.lane.b32.xlu0 %v583, 112
        %v734 = vpop.permute.xlu0 %733
        %735 = vrot.lane.b32.xlu0 %v585, 112
        %v736 = vpop.permute.xlu0 %735
        %vm741 = vcmask 654336
        %v742 = vsel %vm741, %v578, %v706
        %v743 = vsel %vm741, %v580, %v708
        %v744 = vsel %vm741, %v583, %v710
        %v745 = vsel %vm741, %v585, %v712
        %vm746 = vcmask 261120
        %v747 = vsel %vm746, %v706, %v718
        %v748 = vsel %vm746, %v708, %v720
        %v749 = vsel %vm746, %v710, %v722
        %v750 = vsel %vm746, %v712, %v724
        %vm751 = vcmask 916480
        %v752 = vsel %vm751, %v747, %v730
        %v753 = vsel %vm751, %v748, %v732
        %v754 = vsel %vm751, %v749, %v734
        %v755 = vsel %vm751, %v750, %v736
        %v756 = vmul.f32 %v616, %v742
        %v757 = vmul.f32 %v654, %v752
        %v758 = vmul.f32 %v692, %v730
        %v759 = vmul.f32 %v618, %v743
        %v760 = vmul.f32 %v656, %v753
        %v761 = vmul.f32 %v694, %v732
        %v762 = vmul.f32 %v621, %v744
        %v763 = vmul.f32 %v659, %v754
        %v764 = vmul.f32 %v697, %v734
        %v765 = vmul.f32 %v623, %v745
        %v766 = vmul.f32 %v661, %v755
        %v767 = vmul.f32 %v699, %v736
        %v768 = vpack.c.bf16 %v759, %v756
        %v769 = vpack.c.bf16 %v760, %v757
        %v770 = vpack.c.bf16 %v761, %v758
        %v771 = vpack.c.bf16 %v765, %v762
        %v772 = vpack.c.bf16 %v766, %v763
        %v773 = vpack.c.bf16 %v767, %v764
        %v774 = vld [vmem:[%s2] sm:$0xf]
        %v775 = vld [vmem:[%s2 + $0x4] sm:$0xf]
        %v776 = vld [vmem:[%s2 + $0x8] sm:$0xf]
        %v777 = vld [vmem:[%s2 + $0xc] sm:$0xf]
        %v778 = vld [vmem:[%s2 + $0x10] sm:$0xf]
        %v779 = vld [vmem:[%s2 + $0x14] sm:$0xf]
        %v780 = vld [vmem:[%s2 + $0x18] sm:$0xf]
        %v781 = vld [vmem:[%s2 + $0x1c] sm:$0xf]
        %v782 = vld [vmem:[%s2 + $0x20] sm:$0xf]
        %v783 = vld [vmem:[%s2 + $0x24] sm:$0xf]
        %v784 = vld [vmem:[%s2 + $0x28] sm:$0xf]
        %v785 = vld [vmem:[%s2 + $0x2c] sm:$0xf]
        %v786 = vld [vmem:[%s2 + $0x30] sm:$0xf]
        %v787 = vld [vmem:[%s2 + $0x34] sm:$0xf]
        %v788 = vld [vmem:[%s2 + $0x38] sm:$0xf]
        %v789 = vld [vmem:[%s2 + $0x3c] sm:$0xf]
        %v790 = vld [vmem:[%s2 + $0x40] sm:$0xf]
        %v791 = vld [vmem:[%s2 + $0x44] sm:$0xf]
        %v792 = vld [vmem:[%s2 + $0x48] sm:$0xf]
        %v793 = vld [vmem:[%s2 + $0x4c] sm:$0xf]
        %v794 = vld [vmem:[%s2 + $0x50] sm:$0xf]
        %v795 = vld [vmem:[%s2 + $0x54] sm:$0xf]
        %v796 = vld [vmem:[%s2 + $0x58] sm:$0xf]
        %v797 = vld [vmem:[%s2 + $0x5c] sm:$0xf]
        %v798 = vld [vmem:[%s2 + $0x60] sm:$0xf]
        %v799 = vld [vmem:[%s2 + $0x64] sm:$0xf]
        %v800 = vld [vmem:[%s2 + $0x68] sm:$0xf]
        %v801 = vld [vmem:[%s2 + $0x6c] sm:$0xf]
        %v802 = vld [vmem:[%s2 + $0x70] sm:$0xf]
        %v803 = vld [vmem:[%s2 + $0x74] sm:$0xf]
        %v804 = vld [vmem:[%s2 + $0x78] sm:$0xf]
        %v805 = vld [vmem:[%s2 + $0x7c] sm:$0xf]
        %v806 = vld [vmem:[%s2 + $0x80] sm:$0xf]
        %v807 = vld [vmem:[%s2 + $0x84] sm:$0xf]
        %v808 = vld [vmem:[%s2 + $0x88] sm:$0xf]
        %v809 = vld [vmem:[%s2 + $0x8c] sm:$0xf]
        %v810 = vld [vmem:[%s2 + $0x90] sm:$0xf]
        %v811 = vld [vmem:[%s2 + $0x94] sm:$0xf]
        %v812 = vld [vmem:[%s2 + $0x98] sm:$0xf]
        %v813 = vld [vmem:[%s2 + $0x9c] sm:$0xf]
        %v854 = vunpack.c.l.b16 %v774
        %v855 = vunpack.c.l.b16 %v775
        %v856 = vunpack.c.l.b16 %v776
        %v857 = vunpack.c.l.b16 %v777
        %v858 = vunpack.c.l.b16 %v778
        %v859 = vunpack.c.l.b16 %v779
        %v860 = vunpack.c.l.b16 %v780
        %v861 = vunpack.c.l.b16 %v781
        %v862 = vunpack.c.l.b16 %v782
        %v863 = vunpack.c.l.b16 %v783
        %v864 = vunpack.c.l.b16 %v784
        %v865 = vunpack.c.l.b16 %v785
        %v866 = vunpack.c.l.b16 %v786
        %v867 = vunpack.c.l.b16 %v787
        %v868 = vunpack.c.l.b16 %v788
        %v869 = vunpack.c.l.b16 %v789
        %v870 = vunpack.c.l.b16 %v790
        %v871 = vunpack.c.l.b16 %v791
        %v872 = vunpack.c.l.b16 %v792
        %v873 = vunpack.c.l.b16 %v793
        %v874 = vunpack.c.l.b16 %v794
        %v875 = vunpack.c.l.b16 %v795
        %v876 = vunpack.c.l.b16 %v796
        %v877 = vunpack.c.l.b16 %v797
        %v878 = vunpack.c.l.b16 %v798
        %v879 = vunpack.c.l.b16 %v799
        %v880 = vunpack.c.l.b16 %v800
        %v881 = vunpack.c.l.b16 %v801
        %v882 = vunpack.c.l.b16 %v802
        %v883 = vunpack.c.l.b16 %v803
        %v884 = vunpack.c.l.b16 %v804
        %v885 = vunpack.c.l.b16 %v805
        %v886 = vunpack.c.l.b16 %v806
        %v887 = vunpack.c.l.b16 %v807
        %v888 = vunpack.c.l.b16 %v808
        %v889 = vunpack.c.l.b16 %v809
        %v890 = vunpack.c.l.b16 %v810
        %v891 = vunpack.c.l.b16 %v811
        %v892 = vunpack.c.l.b16 %v812
        %v893 = vunpack.c.l.b16 %v813
        %v894 = vpack.c.b16 %v855, %v854
        %v895 = vpack.c.b16 %v857, %v856
        %v896 = vpack.c.b16 %v859, %v858
        %v897 = vpack.c.b16 %v861, %v860
        %v898 = vpack.c.b16 %v863, %v862
        %v899 = vpack.c.b16 %v865, %v864
        %v900 = vpack.c.b16 %v867, %v866
        %v901 = vpack.c.b16 %v869, %v868
        %v902 = vpack.c.b16 %v871, %v870
        %v903 = vpack.c.b16 %v873, %v872
        %v904 = vpack.c.b16 %v875, %v874
        %v905 = vpack.c.b16 %v877, %v876
        %v906 = vpack.c.b16 %v879, %v878
        %v907 = vpack.c.b16 %v881, %v880
        %v908 = vpack.c.b16 %v883, %v882
        %v909 = vpack.c.b16 %v885, %v884
        %v910 = vpack.c.b16 %v887, %v886
        %v911 = vpack.c.b16 %v889, %v888
        %v912 = vpack.c.b16 %v891, %v890
        %v913 = vpack.c.b16 %v893, %v892
        %vm934 = vcmask 523264
        %v936 = vsel %vm934, %v770, 0
        %v939 = vsel %vm934, %v773, 0
        %941 = vmatpush.bf16.msra.mxu0 %v901
        %942 = vmatpush.bf16.msra.mxu0 %v900
        %943 = vmatpush.bf16.msra.mxu0 %v899
        %944 = vmatpush.bf16.msra.mxu0 %v898
        %945 = vmatpush.bf16.msra.mxu0 %v897
        %946 = vmatpush.bf16.msra.mxu0 %v896
        %947 = vmatpush.bf16.msra.mxu0 %v895
        %948 = vmatpush.bf16.msra.mxu0 %v894
        %949 = vmatmul.bf16.gmra.mxu0 %v768
        %v950 = vpop.f32.mrf.mxu0
        %v951 = vadd.f32 0.0, %v950
        %v952 = vpop.f32.mrf.mxu0
        %v953 = vadd.f32 0.0, %v952
        %954 = vmatmul.bf16.gmra.mxu0 %v771
        %v955 = vpop.f32.mrf.mxu0
        %v956 = vadd.f32 0.0, %v955
        %v957 = vpop.f32.mrf.mxu0
        %v958 = vadd.f32 0.0, %v957
        %959 = vdwg.mxu0
        %960 = vmatpush.bf16.msra.mxu0 %v909
        %961 = vmatpush.bf16.msra.mxu0 %v908
        %962 = vmatpush.bf16.msra.mxu0 %v907
        %963 = vmatpush.bf16.msra.mxu0 %v906
        %964 = vmatpush.bf16.msra.mxu0 %v905
        %965 = vmatpush.bf16.msra.mxu0 %v904
        %966 = vmatpush.bf16.msra.mxu0 %v903
        %967 = vmatpush.bf16.msra.mxu0 %v902
        %968 = vmatmul.bf16.gmra.mxu0 %v769
        %v969 = vpop.f32.mrf.mxu0
        %v970 = vadd.f32 %v951, %v969
        %v971 = vpop.f32.mrf.mxu0
        %v972 = vadd.f32 %v953, %v971
        %973 = vmatmul.bf16.gmra.mxu0 %v772
        %v974 = vpop.f32.mrf.mxu0
        %v975 = vadd.f32 %v956, %v974
        %v976 = vpop.f32.mrf.mxu0
        %v977 = vadd.f32 %v958, %v976
        %978 = vdwg.mxu0
        %979 = vmatpush.bf16.msra.mxu0 0
        %980 = vmatpush.bf16.msra.mxu0 0
        %981 = vmatpush.bf16.msra.mxu0 0
        %982 = vmatpush.bf16.msra.mxu0 0
        %983 = vmatpush.bf16.msra.mxu0 %v913
        %984 = vmatpush.bf16.msra.mxu0 %v912
        %985 = vmatpush.bf16.msra.mxu0 %v911
        %986 = vmatpush.bf16.msra.mxu0 %v910
        %987 = vmatmul.bf16.gmra.mxu0 %v936
        %v988 = vpop.f32.mrf.mxu0
        %v989 = vadd.f32 %v970, %v988
        %v990 = vpop.f32.mrf.mxu0
        %v991 = vadd.f32 %v972, %v990
        %992 = vmatmul.bf16.gmra.mxu0 %v939
        %v993 = vpop.f32.mrf.mxu0
        %v994 = vadd.f32 %v975, %v993
        %v995 = vpop.f32.mrf.mxu0
        %v996 = vadd.f32 %v977, %v995
        %997 = vdwg.mxu0
        %vm998 = vcmask 31744
        %v999 = vsel %vm998, %v989, -inf
        %1000 = vmax.xlane.f32.xlu0 %v999
        %v1001 = vpop.xlane.xlu0 %1000
        %v1002 = vsel %vm998, %v991, -inf
        %1003 = vmax.xlane.f32.xlu0 %v1002
        %v1004 = vpop.xlane.xlu0 %1003
        %v1005 = vsel %vm998, %v994, -inf
        %1006 = vmax.xlane.f32.xlu0 %v1005
        %v1007 = vpop.xlane.xlu0 %1006
        %v1008 = vsel %vm998, %v996, -inf
        %1009 = vmax.xlane.f32.xlu0 %v1008
        %v1010 = vpop.xlane.xlu0 %1009
        %v1011 = vsub.f32 %v989, %v1001
        %v1012 = vsub.f32 %v991, %v1004
        %v1013 = vsub.f32 %v994, %v1007
        %v1014 = vsub.f32 %v996, %v1010
        %v1015 = vmul.f32 %v1011, 1.442695
        %v1016 = vpow.pop %v1015
        %v1017 = vmul.f32 %v1012, 1.442695
        %v1018 = vpow.pop %v1017
        %v1019 = vmul.f32 %v1013, 1.442695
        %v1020 = vpow.pop %v1019
        %v1021 = vmul.f32 %v1014, 1.442695
        %v1022 = vpow.pop %v1021
        %v1023 = vsel %vm998, %v1016, 0.0
        %1024 = vadd.xlane.f32.xlu0 %v1023
        %v1025 = vpop.xlane.xlu0 %1024
        %v1026 = vsel %vm998, %v1018, 0.0
        %1027 = vadd.xlane.f32.xlu0 %v1026
        %v1028 = vpop.xlane.xlu0 %1027
        %v1029 = vsel %vm998, %v1020, 0.0
        %1030 = vadd.xlane.f32.xlu0 %v1029
        %v1031 = vpop.xlane.xlu0 %1030
        %v1032 = vsel %vm998, %v1022, 0.0
        %1033 = vadd.xlane.f32.xlu0 %v1032
        %v1034 = vpop.xlane.xlu0 %1033
        %v1035 = vrcp.pop %v1025
        %v1036 = vrcp.pop %v1028
        %v1037 = vrcp.pop %v1031
        %v1038 = vrcp.pop %v1034
        %v1039 = vmul.f32 %v1016, %v1035
        %v1040 = vmul.f32 %v1018, %v1036
        %v1041 = vmul.f32 %v1020, %v1037
        %v1042 = vmul.f32 %v1022, %v1038
        %1044 = vset.pattern.permute.xlu0 0
        %1045 = vperm.xlu0 %1044, %v1039
        %v1046 = vpop.permute.xlu0 %1045
        %1049 = vset.pattern.permute.xlu0 0
        %1050 = vperm.xlu0 %1049, %v1040
        %v1051 = vpop.permute.xlu0 %1050
        %1054 = vset.pattern.permute.xlu0 0
        %1055 = vperm.xlu0 %1054, %v1041
        %v1056 = vpop.permute.xlu0 %1055
        %1059 = vset.pattern.permute.xlu0 0
        %1060 = vperm.xlu0 %1059, %v1042
        %v1061 = vpop.permute.xlu0 %1060
        %v1063 = vmul.f32 %v1046, %v180
        %v1064 = vmul.f32 %v1051, %v182
        %v1065 = vmul.f32 %v1056, %v184
        %v1066 = vmul.f32 %v1061, %v186
        %1067 = vset.pattern.permute.xlu0 1
        %1068 = vperm.xlu0 %1067, %v1039
        %v1069 = vpop.permute.xlu0 %1068
        %1071 = vset.pattern.permute.xlu0 1
        %1072 = vperm.xlu0 %1071, %v1040
        %v1073 = vpop.permute.xlu0 %1072
        %1075 = vset.pattern.permute.xlu0 1
        %1076 = vperm.xlu0 %1075, %v1041
        %v1077 = vpop.permute.xlu0 %1076
        %1079 = vset.pattern.permute.xlu0 1
        %1080 = vperm.xlu0 %1079, %v1042
        %v1081 = vpop.permute.xlu0 %1080
        %v1083 = vmul.f32 %v1069, %v180
        %v1084 = vmul.f32 %v1073, %v182
        %v1085 = vmul.f32 %v1077, %v184
        %v1086 = vmul.f32 %v1081, %v186
        %1091 = vrot.lane.b32.xlu0 %v1083, 72
        %v1092 = vpop.permute.xlu0 %1091
        %1093 = vrot.lane.b32.xlu0 %v1084, 72
        %v1094 = vpop.permute.xlu0 %1093
        %1095 = vrot.lane.b32.xlu0 %v1085, 72
        %v1096 = vpop.permute.xlu0 %1095
        %1097 = vrot.lane.b32.xlu0 %v1086, 72
        %v1098 = vpop.permute.xlu0 %1097
        %v1103 = vadd.f32 %v1063, %v1092
        %v1104 = vadd.f32 %v1064, %v1094
        %v1105 = vadd.f32 %v1065, %v1096
        %v1106 = vadd.f32 %v1066, %v1098
        %1107 = vset.pattern.permute.xlu0 2
        %1108 = vperm.xlu0 %1107, %v1039
        %v1109 = vpop.permute.xlu0 %1108
        %1111 = vset.pattern.permute.xlu0 2
        %1112 = vperm.xlu0 %1111, %v1040
        %v1113 = vpop.permute.xlu0 %1112
        %1115 = vset.pattern.permute.xlu0 2
        %1116 = vperm.xlu0 %1115, %v1041
        %v1117 = vpop.permute.xlu0 %1116
        %1119 = vset.pattern.permute.xlu0 2
        %1120 = vperm.xlu0 %1119, %v1042
        %v1121 = vpop.permute.xlu0 %1120
        %v1123 = vmul.f32 %v1109, %v180
        %v1124 = vmul.f32 %v1109, %v181
        %v1125 = vmul.f32 %v1113, %v182
        %v1126 = vmul.f32 %v1113, %v183
        %v1127 = vmul.f32 %v1117, %v184
        %v1128 = vmul.f32 %v1117, %v185
        %v1129 = vmul.f32 %v1121, %v186
        %v1130 = vmul.f32 %v1121, %v187
        %1139 = vrot.lane.b32.xlu0 %v1123, 16
        %v1140 = vpop.permute.xlu0 %1139
        %1141 = vrot.lane.b32.xlu0 %v1124, 16
        %v1142 = vpop.permute.xlu0 %1141
        %1143 = vrot.lane.b32.xlu0 %v1125, 16
        %v1144 = vpop.permute.xlu0 %1143
        %1145 = vrot.lane.b32.xlu0 %v1126, 16
        %v1146 = vpop.permute.xlu0 %1145
        %1147 = vrot.lane.b32.xlu0 %v1127, 16
        %v1148 = vpop.permute.xlu0 %1147
        %1149 = vrot.lane.b32.xlu0 %v1128, 16
        %v1150 = vpop.permute.xlu0 %1149
        %1151 = vrot.lane.b32.xlu0 %v1129, 16
        %v1152 = vpop.permute.xlu0 %1151
        %1153 = vrot.lane.b32.xlu0 %v1130, 16
        %v1154 = vpop.permute.xlu0 %1153
        %vm1155 = vcmask 130048
        %v1156 = vsel %vm1155, %v1140, %v1142
        %v1157 = vsel %vm1155, %v1144, %v1146
        %v1158 = vsel %vm1155, %v1148, %v1150
        %v1159 = vsel %vm1155, %v1152, %v1154
        %v1164 = vadd.f32 %v1103, %v1156
        %v1165 = vadd.f32 %v1104, %v1157
        %v1166 = vadd.f32 %v1105, %v1158
        %v1167 = vadd.f32 %v1106, %v1159
        %1168 = vset.pattern.permute.xlu0 3
        %1169 = vperm.xlu0 %1168, %v1039
        %v1170 = vpop.permute.xlu0 %1169
        %1172 = vset.pattern.permute.xlu0 3
        %1173 = vperm.xlu0 %1172, %v1040
        %v1174 = vpop.permute.xlu0 %1173
        %1176 = vset.pattern.permute.xlu0 3
        %1177 = vperm.xlu0 %1176, %v1041
        %v1178 = vpop.permute.xlu0 %1177
        %1180 = vset.pattern.permute.xlu0 3
        %1181 = vperm.xlu0 %1180, %v1042
        %v1182 = vpop.permute.xlu0 %1181
        %v1184 = vmul.f32 %v1170, %v181
        %v1185 = vmul.f32 %v1174, %v183
        %v1186 = vmul.f32 %v1178, %v185
        %v1187 = vmul.f32 %v1182, %v187
        %1192 = vrot.lane.b32.xlu0 %v1184, 88
        %v1193 = vpop.permute.xlu0 %1192
        %1194 = vrot.lane.b32.xlu0 %v1185, 88
        %v1195 = vpop.permute.xlu0 %1194
        %1196 = vrot.lane.b32.xlu0 %v1186, 88
        %v1197 = vpop.permute.xlu0 %1196
        %1198 = vrot.lane.b32.xlu0 %v1187, 88
        %v1199 = vpop.permute.xlu0 %1198
        %v1204 = vadd.f32 %v1164, %v1193
        %v1205 = vadd.f32 %v1165, %v1195
        %v1206 = vadd.f32 %v1166, %v1197
        %v1207 = vadd.f32 %v1167, %v1199
        %vm1208 = vcmask 64544
        %v1209 = vsel %vm1208, %v989, -inf
        %1210 = vmax.xlane.f32.xlu0 %v1209
        %v1211 = vpop.xlane.xlu0 %1210
        %v1212 = vsel %vm1208, %v991, -inf
        %1213 = vmax.xlane.f32.xlu0 %v1212
        %v1214 = vpop.xlane.xlu0 %1213
        %v1215 = vsel %vm1208, %v994, -inf
        %1216 = vmax.xlane.f32.xlu0 %v1215
        %v1217 = vpop.xlane.xlu0 %1216
        %v1218 = vsel %vm1208, %v996, -inf
        %1219 = vmax.xlane.f32.xlu0 %v1218
        %v1220 = vpop.xlane.xlu0 %1219
        %v1221 = vsub.f32 %v989, %v1211
        %v1222 = vsub.f32 %v991, %v1214
        %v1223 = vsub.f32 %v994, %v1217
        %v1224 = vsub.f32 %v996, %v1220
        %v1225 = vmul.f32 %v1221, 1.442695
        %v1226 = vpow.pop %v1225
        %v1227 = vmul.f32 %v1222, 1.442695
        %v1228 = vpow.pop %v1227
        %v1229 = vmul.f32 %v1223, 1.442695
        %v1230 = vpow.pop %v1229
        %v1231 = vmul.f32 %v1224, 1.442695
        %v1232 = vpow.pop %v1231
        %1237 = vrot.lane.b32.xlu0 %v1226, 124
        %v1238 = vpop.permute.xlu0 %1237
        %1239 = vrot.lane.b32.xlu0 %v1228, 124
        %v1240 = vpop.permute.xlu0 %1239
        %1241 = vrot.lane.b32.xlu0 %v1230, 124
        %v1242 = vpop.permute.xlu0 %1241
        %1243 = vrot.lane.b32.xlu0 %v1232, 124
        %v1244 = vpop.permute.xlu0 %1243
        %v1249 = vsel %vm998, %v1238, 0.0
        %1250 = vadd.xlane.f32.xlu0 %v1249
        %v1251 = vpop.xlane.xlu0 %1250
        %v1252 = vsel %vm998, %v1240, 0.0
        %1253 = vadd.xlane.f32.xlu0 %v1252
        %v1254 = vpop.xlane.xlu0 %1253
        %v1255 = vsel %vm998, %v1242, 0.0
        %1256 = vadd.xlane.f32.xlu0 %v1255
        %v1257 = vpop.xlane.xlu0 %1256
        %v1258 = vsel %vm998, %v1244, 0.0
        %1259 = vadd.xlane.f32.xlu0 %v1258
        %v1260 = vpop.xlane.xlu0 %1259
        %v1261 = vrcp.pop %v1251
        %v1262 = vrcp.pop %v1254
        %v1263 = vrcp.pop %v1257
        %v1264 = vrcp.pop %v1260
        %v1265 = vmul.f32 %v1226, %v1261
        %v1266 = vmul.f32 %v1228, %v1262
        %v1267 = vmul.f32 %v1230, %v1263
        %v1268 = vmul.f32 %v1232, %v1264
        %1270 = vset.pattern.permute.xlu0 4
        %1271 = vperm.xlu0 %1270, %v1265
        %v1272 = vpop.permute.xlu0 %1271
        %1275 = vset.pattern.permute.xlu0 4
        %1276 = vperm.xlu0 %1275, %v1266
        %v1277 = vpop.permute.xlu0 %1276
        %1280 = vset.pattern.permute.xlu0 4
        %1281 = vperm.xlu0 %1280, %v1267
        %v1282 = vpop.permute.xlu0 %1281
        %1285 = vset.pattern.permute.xlu0 4
        %1286 = vperm.xlu0 %1285, %v1268
        %v1287 = vpop.permute.xlu0 %1286
        %v1289 = vmul.f32 %v1272, %v180
        %v1290 = vmul.f32 %v1277, %v182
        %v1291 = vmul.f32 %v1282, %v184
        %v1292 = vmul.f32 %v1287, %v186
        %1293 = vset.pattern.permute.xlu0 5
        %1294 = vperm.xlu0 %1293, %v1265
        %v1295 = vpop.permute.xlu0 %1294
        %1297 = vset.pattern.permute.xlu0 5
        %1298 = vperm.xlu0 %1297, %v1266
        %v1299 = vpop.permute.xlu0 %1298
        %1301 = vset.pattern.permute.xlu0 5
        %1302 = vperm.xlu0 %1301, %v1267
        %v1303 = vpop.permute.xlu0 %1302
        %1305 = vset.pattern.permute.xlu0 5
        %1306 = vperm.xlu0 %1305, %v1268
        %v1307 = vpop.permute.xlu0 %1306
        %v1309 = vmul.f32 %v1295, %v180
        %v1310 = vmul.f32 %v1299, %v182
        %v1311 = vmul.f32 %v1303, %v184
        %v1312 = vmul.f32 %v1307, %v186
        %1317 = vrot.lane.b32.xlu0 %v1309, 72
        %v1318 = vpop.permute.xlu0 %1317
        %1319 = vrot.lane.b32.xlu0 %v1310, 72
        %v1320 = vpop.permute.xlu0 %1319
        %1321 = vrot.lane.b32.xlu0 %v1311, 72
        %v1322 = vpop.permute.xlu0 %1321
        %1323 = vrot.lane.b32.xlu0 %v1312, 72
        %v1324 = vpop.permute.xlu0 %1323
        %v1329 = vadd.f32 %v1289, %v1318
        %v1330 = vadd.f32 %v1290, %v1320
        %v1331 = vadd.f32 %v1291, %v1322
        %v1332 = vadd.f32 %v1292, %v1324
        %1333 = vset.pattern.permute.xlu0 6
        %1334 = vperm.xlu0 %1333, %v1265
        %v1335 = vpop.permute.xlu0 %1334
        %1337 = vset.pattern.permute.xlu0 6
        %1338 = vperm.xlu0 %1337, %v1266
        %v1339 = vpop.permute.xlu0 %1338
        %1341 = vset.pattern.permute.xlu0 6
        %1342 = vperm.xlu0 %1341, %v1267
        %v1343 = vpop.permute.xlu0 %1342
        %1345 = vset.pattern.permute.xlu0 6
        %1346 = vperm.xlu0 %1345, %v1268
        %v1347 = vpop.permute.xlu0 %1346
        %v1349 = vmul.f32 %v1335, %v180
        %v1350 = vmul.f32 %v1335, %v181
        %v1351 = vmul.f32 %v1339, %v182
        %v1352 = vmul.f32 %v1339, %v183
        %v1353 = vmul.f32 %v1343, %v184
        %v1354 = vmul.f32 %v1343, %v185
        %v1355 = vmul.f32 %v1347, %v186
        %v1356 = vmul.f32 %v1347, %v187
        %1365 = vrot.lane.b32.xlu0 %v1349, 16
        %v1366 = vpop.permute.xlu0 %1365
        %1367 = vrot.lane.b32.xlu0 %v1350, 16
        %v1368 = vpop.permute.xlu0 %1367
        %1369 = vrot.lane.b32.xlu0 %v1351, 16
        %v1370 = vpop.permute.xlu0 %1369
        %1371 = vrot.lane.b32.xlu0 %v1352, 16
        %v1372 = vpop.permute.xlu0 %1371
        %1373 = vrot.lane.b32.xlu0 %v1353, 16
        %v1374 = vpop.permute.xlu0 %1373
        %1375 = vrot.lane.b32.xlu0 %v1354, 16
        %v1376 = vpop.permute.xlu0 %1375
        %1377 = vrot.lane.b32.xlu0 %v1355, 16
        %v1378 = vpop.permute.xlu0 %1377
        %1379 = vrot.lane.b32.xlu0 %v1356, 16
        %v1380 = vpop.permute.xlu0 %1379
        %v1381 = vsel %vm1155, %v1366, %v1368
        %v1382 = vsel %vm1155, %v1370, %v1372
        %v1383 = vsel %vm1155, %v1374, %v1376
        %v1384 = vsel %vm1155, %v1378, %v1380
        %v1389 = vadd.f32 %v1329, %v1381
        %v1390 = vadd.f32 %v1330, %v1382
        %v1391 = vadd.f32 %v1331, %v1383
        %v1392 = vadd.f32 %v1332, %v1384
        %1393 = vset.pattern.permute.xlu0 7
        %1394 = vperm.xlu0 %1393, %v1265
        %v1395 = vpop.permute.xlu0 %1394
        %1397 = vset.pattern.permute.xlu0 7
        %1398 = vperm.xlu0 %1397, %v1266
        %v1399 = vpop.permute.xlu0 %1398
        %1401 = vset.pattern.permute.xlu0 7
        %1402 = vperm.xlu0 %1401, %v1267
        %v1403 = vpop.permute.xlu0 %1402
        %1405 = vset.pattern.permute.xlu0 7
        %1406 = vperm.xlu0 %1405, %v1268
        %v1407 = vpop.permute.xlu0 %1406
        %v1409 = vmul.f32 %v1395, %v181
        %v1410 = vmul.f32 %v1399, %v183
        %v1411 = vmul.f32 %v1403, %v185
        %v1412 = vmul.f32 %v1407, %v187
        %1417 = vrot.lane.b32.xlu0 %v1409, 88
        %v1418 = vpop.permute.xlu0 %1417
        %1419 = vrot.lane.b32.xlu0 %v1410, 88
        %v1420 = vpop.permute.xlu0 %1419
        %1421 = vrot.lane.b32.xlu0 %v1411, 88
        %v1422 = vpop.permute.xlu0 %1421
        %1423 = vrot.lane.b32.xlu0 %v1412, 88
        %v1424 = vpop.permute.xlu0 %1423
        %v1429 = vadd.f32 %v1389, %v1418
        %v1430 = vadd.f32 %v1390, %v1420
        %v1431 = vadd.f32 %v1391, %v1422
        %v1432 = vadd.f32 %v1392, %v1424
        %vm1433 = vcmask 97344
        %v1434 = vsel %vm1433, %v989, -inf
        %1435 = vmax.xlane.f32.xlu0 %v1434
        %v1436 = vpop.xlane.xlu0 %1435
        %v1437 = vsel %vm1433, %v991, -inf
        %1438 = vmax.xlane.f32.xlu0 %v1437
        %v1439 = vpop.xlane.xlu0 %1438
        %v1440 = vsel %vm1433, %v994, -inf
        %1441 = vmax.xlane.f32.xlu0 %v1440
        %v1442 = vpop.xlane.xlu0 %1441
        %v1443 = vsel %vm1433, %v996, -inf
        %1444 = vmax.xlane.f32.xlu0 %v1443
        %v1445 = vpop.xlane.xlu0 %1444
        %v1446 = vsub.f32 %v989, %v1436
        %v1447 = vsub.f32 %v991, %v1439
        %v1448 = vsub.f32 %v994, %v1442
        %v1449 = vsub.f32 %v996, %v1445
        %v1450 = vmul.f32 %v1446, 1.442695
        %v1451 = vpow.pop %v1450
        %v1452 = vmul.f32 %v1447, 1.442695
        %v1453 = vpow.pop %v1452
        %v1454 = vmul.f32 %v1448, 1.442695
        %v1455 = vpow.pop %v1454
        %v1456 = vmul.f32 %v1449, 1.442695
        %v1457 = vpow.pop %v1456
        %1462 = vrot.lane.b32.xlu0 %v1451, 120
        %v1463 = vpop.permute.xlu0 %1462
        %1464 = vrot.lane.b32.xlu0 %v1453, 120
        %v1465 = vpop.permute.xlu0 %1464
        %1466 = vrot.lane.b32.xlu0 %v1455, 120
        %v1467 = vpop.permute.xlu0 %1466
        %1468 = vrot.lane.b32.xlu0 %v1457, 120
        %v1469 = vpop.permute.xlu0 %1468
        %v1474 = vsel %vm998, %v1463, 0.0
        %1475 = vadd.xlane.f32.xlu0 %v1474
        %v1476 = vpop.xlane.xlu0 %1475
        %v1477 = vsel %vm998, %v1465, 0.0
        %1478 = vadd.xlane.f32.xlu0 %v1477
        %v1479 = vpop.xlane.xlu0 %1478
        %v1480 = vsel %vm998, %v1467, 0.0
        %1481 = vadd.xlane.f32.xlu0 %v1480
        %v1482 = vpop.xlane.xlu0 %1481
        %v1483 = vsel %vm998, %v1469, 0.0
        %1484 = vadd.xlane.f32.xlu0 %v1483
        %v1485 = vpop.xlane.xlu0 %1484
        %v1486 = vrcp.pop %v1476
        %v1487 = vrcp.pop %v1479
        %v1488 = vrcp.pop %v1482
        %v1489 = vrcp.pop %v1485
        %v1490 = vmul.f32 %v1451, %v1486
        %v1491 = vmul.f32 %v1453, %v1487
        %v1492 = vmul.f32 %v1455, %v1488
        %v1493 = vmul.f32 %v1457, %v1489
        %1495 = vset.pattern.permute.xlu0 8
        %1496 = vperm.xlu0 %1495, %v1490
        %v1497 = vpop.permute.xlu0 %1496
        %1500 = vset.pattern.permute.xlu0 8
        %1501 = vperm.xlu0 %1500, %v1491
        %v1502 = vpop.permute.xlu0 %1501
        %1505 = vset.pattern.permute.xlu0 8
        %1506 = vperm.xlu0 %1505, %v1492
        %v1507 = vpop.permute.xlu0 %1506
        %1510 = vset.pattern.permute.xlu0 8
        %1511 = vperm.xlu0 %1510, %v1493
        %v1512 = vpop.permute.xlu0 %1511
        %v1514 = vmul.f32 %v1497, %v180
        %v1515 = vmul.f32 %v1502, %v182
        %v1516 = vmul.f32 %v1507, %v184
        %v1517 = vmul.f32 %v1512, %v186
        %1518 = vset.pattern.permute.xlu0 9
        %1519 = vperm.xlu0 %1518, %v1490
        %v1520 = vpop.permute.xlu0 %1519
        %1522 = vset.pattern.permute.xlu0 9
        %1523 = vperm.xlu0 %1522, %v1491
        %v1524 = vpop.permute.xlu0 %1523
        %1526 = vset.pattern.permute.xlu0 9
        %1527 = vperm.xlu0 %1526, %v1492
        %v1528 = vpop.permute.xlu0 %1527
        %1530 = vset.pattern.permute.xlu0 9
        %1531 = vperm.xlu0 %1530, %v1493
        %v1532 = vpop.permute.xlu0 %1531
        %v1534 = vmul.f32 %v1520, %v180
        %v1535 = vmul.f32 %v1524, %v182
        %v1536 = vmul.f32 %v1528, %v184
        %v1537 = vmul.f32 %v1532, %v186
        %1542 = vrot.lane.b32.xlu0 %v1534, 72
        %v1543 = vpop.permute.xlu0 %1542
        %1544 = vrot.lane.b32.xlu0 %v1535, 72
        %v1545 = vpop.permute.xlu0 %1544
        %1546 = vrot.lane.b32.xlu0 %v1536, 72
        %v1547 = vpop.permute.xlu0 %1546
        %1548 = vrot.lane.b32.xlu0 %v1537, 72
        %v1549 = vpop.permute.xlu0 %1548
        %v1554 = vadd.f32 %v1514, %v1543
        %v1555 = vadd.f32 %v1515, %v1545
        %v1556 = vadd.f32 %v1516, %v1547
        %v1557 = vadd.f32 %v1517, %v1549
        %1558 = vset.pattern.permute.xlu0 10
        %1559 = vperm.xlu0 %1558, %v1490
        %v1560 = vpop.permute.xlu0 %1559
        %1562 = vset.pattern.permute.xlu0 10
        %1563 = vperm.xlu0 %1562, %v1491
        %v1564 = vpop.permute.xlu0 %1563
        %1566 = vset.pattern.permute.xlu0 10
        %1567 = vperm.xlu0 %1566, %v1492
        %v1568 = vpop.permute.xlu0 %1567
        %1570 = vset.pattern.permute.xlu0 10
        %1571 = vperm.xlu0 %1570, %v1493
        %v1572 = vpop.permute.xlu0 %1571
        %v1574 = vmul.f32 %v1560, %v180
        %v1575 = vmul.f32 %v1560, %v181
        %v1576 = vmul.f32 %v1564, %v182
        %v1577 = vmul.f32 %v1564, %v183
        %v1578 = vmul.f32 %v1568, %v184
        %v1579 = vmul.f32 %v1568, %v185
        %v1580 = vmul.f32 %v1572, %v186
        %v1581 = vmul.f32 %v1572, %v187
        %1590 = vrot.lane.b32.xlu0 %v1574, 16
        %v1591 = vpop.permute.xlu0 %1590
        %1592 = vrot.lane.b32.xlu0 %v1575, 16
        %v1593 = vpop.permute.xlu0 %1592
        %1594 = vrot.lane.b32.xlu0 %v1576, 16
        %v1595 = vpop.permute.xlu0 %1594
        %1596 = vrot.lane.b32.xlu0 %v1577, 16
        %v1597 = vpop.permute.xlu0 %1596
        %1598 = vrot.lane.b32.xlu0 %v1578, 16
        %v1599 = vpop.permute.xlu0 %1598
        %1600 = vrot.lane.b32.xlu0 %v1579, 16
        %v1601 = vpop.permute.xlu0 %1600
        %1602 = vrot.lane.b32.xlu0 %v1580, 16
        %v1603 = vpop.permute.xlu0 %1602
        %1604 = vrot.lane.b32.xlu0 %v1581, 16
        %v1605 = vpop.permute.xlu0 %1604
        %v1606 = vsel %vm1155, %v1591, %v1593
        %v1607 = vsel %vm1155, %v1595, %v1597
        %v1608 = vsel %vm1155, %v1599, %v1601
        %v1609 = vsel %vm1155, %v1603, %v1605
        %v1614 = vadd.f32 %v1554, %v1606
        %v1615 = vadd.f32 %v1555, %v1607
        %v1616 = vadd.f32 %v1556, %v1608
        %v1617 = vadd.f32 %v1557, %v1609
        %1618 = vset.pattern.permute.xlu0 11
        %1619 = vperm.xlu0 %1618, %v1490
        %v1620 = vpop.permute.xlu0 %1619
        %1622 = vset.pattern.permute.xlu0 11
        %1623 = vperm.xlu0 %1622, %v1491
        %v1624 = vpop.permute.xlu0 %1623
        %1626 = vset.pattern.permute.xlu0 11
        %1627 = vperm.xlu0 %1626, %v1492
        %v1628 = vpop.permute.xlu0 %1627
        %1630 = vset.pattern.permute.xlu0 11
        %1631 = vperm.xlu0 %1630, %v1493
        %v1632 = vpop.permute.xlu0 %1631
        %v1634 = vmul.f32 %v1620, %v181
        %v1635 = vmul.f32 %v1624, %v183
        %v1636 = vmul.f32 %v1628, %v185
        %v1637 = vmul.f32 %v1632, %v187
        %1642 = vrot.lane.b32.xlu0 %v1634, 88
        %v1643 = vpop.permute.xlu0 %1642
        %1644 = vrot.lane.b32.xlu0 %v1635, 88
        %v1645 = vpop.permute.xlu0 %1644
        %1646 = vrot.lane.b32.xlu0 %v1636, 88
        %v1647 = vpop.permute.xlu0 %1646
        %1648 = vrot.lane.b32.xlu0 %v1637, 88
        %v1649 = vpop.permute.xlu0 %1648
        %v1654 = vadd.f32 %v1614, %v1643
        %v1655 = vadd.f32 %v1615, %v1645
        %v1656 = vadd.f32 %v1616, %v1647
        %v1657 = vadd.f32 %v1617, %v1649
        %vm1658 = vcmask 130144
        %v1659 = vsel %vm1658, %v989, -inf
        %1660 = vmax.xlane.f32.xlu0 %v1659
        %v1661 = vpop.xlane.xlu0 %1660
        %v1662 = vsel %vm1658, %v991, -inf
        %1663 = vmax.xlane.f32.xlu0 %v1662
        %v1664 = vpop.xlane.xlu0 %1663
        %v1665 = vsel %vm1658, %v994, -inf
        %1666 = vmax.xlane.f32.xlu0 %v1665
        %v1667 = vpop.xlane.xlu0 %1666
        %v1668 = vsel %vm1658, %v996, -inf
        %1669 = vmax.xlane.f32.xlu0 %v1668
        %v1670 = vpop.xlane.xlu0 %1669
        %v1671 = vsub.f32 %v989, %v1661
        %v1672 = vsub.f32 %v991, %v1664
        %v1673 = vsub.f32 %v994, %v1667
        %v1674 = vsub.f32 %v996, %v1670
        %v1675 = vmul.f32 %v1671, 1.442695
        %v1676 = vpow.pop %v1675
        %v1677 = vmul.f32 %v1672, 1.442695
        %v1678 = vpow.pop %v1677
        %v1679 = vmul.f32 %v1673, 1.442695
        %v1680 = vpow.pop %v1679
        %v1681 = vmul.f32 %v1674, 1.442695
        %v1682 = vpow.pop %v1681
        %1687 = vrot.lane.b32.xlu0 %v1676, 116
        %v1688 = vpop.permute.xlu0 %1687
        %1689 = vrot.lane.b32.xlu0 %v1678, 116
        %v1690 = vpop.permute.xlu0 %1689
        %1691 = vrot.lane.b32.xlu0 %v1680, 116
        %v1692 = vpop.permute.xlu0 %1691
        %1693 = vrot.lane.b32.xlu0 %v1682, 116
        %v1694 = vpop.permute.xlu0 %1693
        %v1699 = vsel %vm998, %v1688, 0.0
        %1700 = vadd.xlane.f32.xlu0 %v1699
        %v1701 = vpop.xlane.xlu0 %1700
        %v1702 = vsel %vm998, %v1690, 0.0
        %1703 = vadd.xlane.f32.xlu0 %v1702
        %v1704 = vpop.xlane.xlu0 %1703
        %v1705 = vsel %vm998, %v1692, 0.0
        %1706 = vadd.xlane.f32.xlu0 %v1705
        %v1707 = vpop.xlane.xlu0 %1706
        %v1708 = vsel %vm998, %v1694, 0.0
        %1709 = vadd.xlane.f32.xlu0 %v1708
        %v1710 = vpop.xlane.xlu0 %1709
        %v1711 = vrcp.pop %v1701
        %v1712 = vrcp.pop %v1704
        %v1713 = vrcp.pop %v1707
        %v1714 = vrcp.pop %v1710
        %v1715 = vmul.f32 %v1676, %v1711
        %v1716 = vmul.f32 %v1678, %v1712
        %v1717 = vmul.f32 %v1680, %v1713
        %v1718 = vmul.f32 %v1682, %v1714
        %1720 = vset.pattern.permute.xlu0 12
        %1721 = vperm.xlu0 %1720, %v1715
        %v1722 = vpop.permute.xlu0 %1721
        %1725 = vset.pattern.permute.xlu0 12
        %1726 = vperm.xlu0 %1725, %v1716
        %v1727 = vpop.permute.xlu0 %1726
        %1730 = vset.pattern.permute.xlu0 12
        %1731 = vperm.xlu0 %1730, %v1717
        %v1732 = vpop.permute.xlu0 %1731
        %1735 = vset.pattern.permute.xlu0 12
        %1736 = vperm.xlu0 %1735, %v1718
        %v1737 = vpop.permute.xlu0 %1736
        %v1739 = vmul.f32 %v1722, %v180
        %v1740 = vmul.f32 %v1727, %v182
        %v1741 = vmul.f32 %v1732, %v184
        %v1742 = vmul.f32 %v1737, %v186
        %1743 = vset.pattern.permute.xlu0 13
        %1744 = vperm.xlu0 %1743, %v1715
        %v1745 = vpop.permute.xlu0 %1744
        %1747 = vset.pattern.permute.xlu0 13
        %1748 = vperm.xlu0 %1747, %v1716
        %v1749 = vpop.permute.xlu0 %1748
        %1751 = vset.pattern.permute.xlu0 13
        %1752 = vperm.xlu0 %1751, %v1717
        %v1753 = vpop.permute.xlu0 %1752
        %1755 = vset.pattern.permute.xlu0 13
        %1756 = vperm.xlu0 %1755, %v1718
        %v1757 = vpop.permute.xlu0 %1756
        %v1759 = vmul.f32 %v1745, %v180
        %v1760 = vmul.f32 %v1749, %v182
        %v1761 = vmul.f32 %v1753, %v184
        %v1762 = vmul.f32 %v1757, %v186
        %1767 = vrot.lane.b32.xlu0 %v1759, 72
        %v1768 = vpop.permute.xlu0 %1767
        %1769 = vrot.lane.b32.xlu0 %v1760, 72
        %v1770 = vpop.permute.xlu0 %1769
        %1771 = vrot.lane.b32.xlu0 %v1761, 72
        %v1772 = vpop.permute.xlu0 %1771
        %1773 = vrot.lane.b32.xlu0 %v1762, 72
        %v1774 = vpop.permute.xlu0 %1773
        %v1779 = vadd.f32 %v1739, %v1768
        %v1780 = vadd.f32 %v1740, %v1770
        %v1781 = vadd.f32 %v1741, %v1772
        %v1782 = vadd.f32 %v1742, %v1774
        %1783 = vset.pattern.permute.xlu0 14
        %1784 = vperm.xlu0 %1783, %v1715
        %v1785 = vpop.permute.xlu0 %1784
        %1787 = vset.pattern.permute.xlu0 14
        %1788 = vperm.xlu0 %1787, %v1716
        %v1789 = vpop.permute.xlu0 %1788
        %1791 = vset.pattern.permute.xlu0 14
        %1792 = vperm.xlu0 %1791, %v1717
        %v1793 = vpop.permute.xlu0 %1792
        %1795 = vset.pattern.permute.xlu0 14
        %1796 = vperm.xlu0 %1795, %v1718
        %v1797 = vpop.permute.xlu0 %1796
        %v1799 = vmul.f32 %v1785, %v180
        %v1800 = vmul.f32 %v1785, %v181
        %v1801 = vmul.f32 %v1789, %v182
        %v1802 = vmul.f32 %v1789, %v183
        %v1803 = vmul.f32 %v1793, %v184
        %v1804 = vmul.f32 %v1793, %v185
        %v1805 = vmul.f32 %v1797, %v186
        %v1806 = vmul.f32 %v1797, %v187
        %1815 = vrot.lane.b32.xlu0 %v1799, 16
        %v1816 = vpop.permute.xlu0 %1815
        %1817 = vrot.lane.b32.xlu0 %v1800, 16
        %v1818 = vpop.permute.xlu0 %1817
        %1819 = vrot.lane.b32.xlu0 %v1801, 16
        %v1820 = vpop.permute.xlu0 %1819
        %1821 = vrot.lane.b32.xlu0 %v1802, 16
        %v1822 = vpop.permute.xlu0 %1821
        %1823 = vrot.lane.b32.xlu0 %v1803, 16
        %v1824 = vpop.permute.xlu0 %1823
        %1825 = vrot.lane.b32.xlu0 %v1804, 16
        %v1826 = vpop.permute.xlu0 %1825
        %1827 = vrot.lane.b32.xlu0 %v1805, 16
        %v1828 = vpop.permute.xlu0 %1827
        %1829 = vrot.lane.b32.xlu0 %v1806, 16
        %v1830 = vpop.permute.xlu0 %1829
        %v1831 = vsel %vm1155, %v1816, %v1818
        %v1832 = vsel %vm1155, %v1820, %v1822
        %v1833 = vsel %vm1155, %v1824, %v1826
        %v1834 = vsel %vm1155, %v1828, %v1830
        %v1839 = vadd.f32 %v1779, %v1831
        %v1840 = vadd.f32 %v1780, %v1832
        %v1841 = vadd.f32 %v1781, %v1833
        %v1842 = vadd.f32 %v1782, %v1834
        %1843 = vset.pattern.permute.xlu0 15
        %1844 = vperm.xlu0 %1843, %v1715
        %v1845 = vpop.permute.xlu0 %1844
        %1847 = vset.pattern.permute.xlu0 15
        %1848 = vperm.xlu0 %1847, %v1716
        %v1849 = vpop.permute.xlu0 %1848
        %1851 = vset.pattern.permute.xlu0 15
        %1852 = vperm.xlu0 %1851, %v1717
        %v1853 = vpop.permute.xlu0 %1852
        %1855 = vset.pattern.permute.xlu0 15
        %1856 = vperm.xlu0 %1855, %v1718
        %v1857 = vpop.permute.xlu0 %1856
        %v1859 = vmul.f32 %v1845, %v181
        %v1860 = vmul.f32 %v1849, %v183
        %v1861 = vmul.f32 %v1853, %v185
        %v1862 = vmul.f32 %v1857, %v187
        %1867 = vrot.lane.b32.xlu0 %v1859, 88
        %v1868 = vpop.permute.xlu0 %1867
        %1869 = vrot.lane.b32.xlu0 %v1860, 88
        %v1870 = vpop.permute.xlu0 %1869
        %1871 = vrot.lane.b32.xlu0 %v1861, 88
        %v1872 = vpop.permute.xlu0 %1871
        %1873 = vrot.lane.b32.xlu0 %v1862, 88
        %v1874 = vpop.permute.xlu0 %1873
        %v1879 = vadd.f32 %v1839, %v1868
        %v1880 = vadd.f32 %v1840, %v1870
        %v1881 = vadd.f32 %v1841, %v1872
        %v1882 = vadd.f32 %v1842, %v1874
        %vm1883 = vcmask 162944
        %v1884 = vsel %vm1883, %v989, -inf
        %1885 = vmax.xlane.f32.xlu0 %v1884
        %v1886 = vpop.xlane.xlu0 %1885
        %v1887 = vsel %vm1883, %v991, -inf
        %1888 = vmax.xlane.f32.xlu0 %v1887
        %v1889 = vpop.xlane.xlu0 %1888
        %v1890 = vsel %vm1883, %v994, -inf
        %1891 = vmax.xlane.f32.xlu0 %v1890
        %v1892 = vpop.xlane.xlu0 %1891
        %v1893 = vsel %vm1883, %v996, -inf
        %1894 = vmax.xlane.f32.xlu0 %v1893
        %v1895 = vpop.xlane.xlu0 %1894
        %v1896 = vsub.f32 %v989, %v1886
        %v1897 = vsub.f32 %v991, %v1889
        %v1898 = vsub.f32 %v994, %v1892
        %v1899 = vsub.f32 %v996, %v1895
        %v1900 = vmul.f32 %v1896, 1.442695
        %v1901 = vpow.pop %v1900
        %v1902 = vmul.f32 %v1897, 1.442695
        %v1903 = vpow.pop %v1902
        %v1904 = vmul.f32 %v1898, 1.442695
        %v1905 = vpow.pop %v1904
        %v1906 = vmul.f32 %v1899, 1.442695
        %v1907 = vpow.pop %v1906
        %1912 = vrot.lane.b32.xlu0 %v1901, 112
        %v1913 = vpop.permute.xlu0 %1912
        %1914 = vrot.lane.b32.xlu0 %v1903, 112
        %v1915 = vpop.permute.xlu0 %1914
        %1916 = vrot.lane.b32.xlu0 %v1905, 112
        %v1917 = vpop.permute.xlu0 %1916
        %1918 = vrot.lane.b32.xlu0 %v1907, 112
        %v1919 = vpop.permute.xlu0 %1918
        %v1924 = vsel %vm998, %v1913, 0.0
        %1925 = vadd.xlane.f32.xlu0 %v1924
        %v1926 = vpop.xlane.xlu0 %1925
        %v1927 = vsel %vm998, %v1915, 0.0
        %1928 = vadd.xlane.f32.xlu0 %v1927
        %v1929 = vpop.xlane.xlu0 %1928
        %v1930 = vsel %vm998, %v1917, 0.0
        %1931 = vadd.xlane.f32.xlu0 %v1930
        %v1932 = vpop.xlane.xlu0 %1931
        %v1933 = vsel %vm998, %v1919, 0.0
        %1934 = vadd.xlane.f32.xlu0 %v1933
        %v1935 = vpop.xlane.xlu0 %1934
        %v1936 = vrcp.pop %v1926
        %v1937 = vrcp.pop %v1929
        %v1938 = vrcp.pop %v1932
        %v1939 = vrcp.pop %v1935
        %v1940 = vmul.f32 %v1901, %v1936
        %v1941 = vmul.f32 %v1903, %v1937
        %v1942 = vmul.f32 %v1905, %v1938
        %v1943 = vmul.f32 %v1907, %v1939
        %1945 = vset.pattern.permute.xlu0 16
        %1946 = vperm.xlu0 %1945, %v1940
        %v1947 = vpop.permute.xlu0 %1946
        %1950 = vset.pattern.permute.xlu0 16
        %1951 = vperm.xlu0 %1950, %v1941
        %v1952 = vpop.permute.xlu0 %1951
        %1955 = vset.pattern.permute.xlu0 16
        %1956 = vperm.xlu0 %1955, %v1942
        %v1957 = vpop.permute.xlu0 %1956
        %1960 = vset.pattern.permute.xlu0 16
        %1961 = vperm.xlu0 %1960, %v1943
        %v1962 = vpop.permute.xlu0 %1961
        %v1964 = vmul.f32 %v1947, %v180
        %v1965 = vmul.f32 %v1952, %v182
        %v1966 = vmul.f32 %v1957, %v184
        %v1967 = vmul.f32 %v1962, %v186
        %1968 = vset.pattern.permute.xlu0 17
        %1969 = vperm.xlu0 %1968, %v1940
        %v1970 = vpop.permute.xlu0 %1969
        %1972 = vset.pattern.permute.xlu0 17
        %1973 = vperm.xlu0 %1972, %v1941
        %v1974 = vpop.permute.xlu0 %1973
        %1976 = vset.pattern.permute.xlu0 17
        %1977 = vperm.xlu0 %1976, %v1942
        %v1978 = vpop.permute.xlu0 %1977
        %1980 = vset.pattern.permute.xlu0 17
        %1981 = vperm.xlu0 %1980, %v1943
        %v1982 = vpop.permute.xlu0 %1981
        %v1984 = vmul.f32 %v1970, %v180
        %v1985 = vmul.f32 %v1974, %v182
        %v1986 = vmul.f32 %v1978, %v184
        %v1987 = vmul.f32 %v1982, %v186
        %1992 = vrot.lane.b32.xlu0 %v1984, 72
        %v1993 = vpop.permute.xlu0 %1992
        %1994 = vrot.lane.b32.xlu0 %v1985, 72
        %v1995 = vpop.permute.xlu0 %1994
        %1996 = vrot.lane.b32.xlu0 %v1986, 72
        %v1997 = vpop.permute.xlu0 %1996
        %1998 = vrot.lane.b32.xlu0 %v1987, 72
        %v1999 = vpop.permute.xlu0 %1998
        %v2004 = vadd.f32 %v1964, %v1993
        %v2005 = vadd.f32 %v1965, %v1995
        %v2006 = vadd.f32 %v1966, %v1997
        %v2007 = vadd.f32 %v1967, %v1999
        %2008 = vset.pattern.permute.xlu0 18
        %2009 = vperm.xlu0 %2008, %v1940
        %v2010 = vpop.permute.xlu0 %2009
        %2012 = vset.pattern.permute.xlu0 18
        %2013 = vperm.xlu0 %2012, %v1941
        %v2014 = vpop.permute.xlu0 %2013
        %2016 = vset.pattern.permute.xlu0 18
        %2017 = vperm.xlu0 %2016, %v1942
        %v2018 = vpop.permute.xlu0 %2017
        %2020 = vset.pattern.permute.xlu0 18
        %2021 = vperm.xlu0 %2020, %v1943
        %v2022 = vpop.permute.xlu0 %2021
        %v2024 = vmul.f32 %v2010, %v180
        %v2025 = vmul.f32 %v2010, %v181
        %v2026 = vmul.f32 %v2014, %v182
        %v2027 = vmul.f32 %v2014, %v183
        %v2028 = vmul.f32 %v2018, %v184
        %v2029 = vmul.f32 %v2018, %v185
        %v2030 = vmul.f32 %v2022, %v186
        %v2031 = vmul.f32 %v2022, %v187
        %2040 = vrot.lane.b32.xlu0 %v2024, 16
        %v2041 = vpop.permute.xlu0 %2040
        %2042 = vrot.lane.b32.xlu0 %v2025, 16
        %v2043 = vpop.permute.xlu0 %2042
        %2044 = vrot.lane.b32.xlu0 %v2026, 16
        %v2045 = vpop.permute.xlu0 %2044
        %2046 = vrot.lane.b32.xlu0 %v2027, 16
        %v2047 = vpop.permute.xlu0 %2046
        %2048 = vrot.lane.b32.xlu0 %v2028, 16
        %v2049 = vpop.permute.xlu0 %2048
        %2050 = vrot.lane.b32.xlu0 %v2029, 16
        %v2051 = vpop.permute.xlu0 %2050
        %2052 = vrot.lane.b32.xlu0 %v2030, 16
        %v2053 = vpop.permute.xlu0 %2052
        %2054 = vrot.lane.b32.xlu0 %v2031, 16
        %v2055 = vpop.permute.xlu0 %2054
        %v2056 = vsel %vm1155, %v2041, %v2043
        %v2057 = vsel %vm1155, %v2045, %v2047
        %v2058 = vsel %vm1155, %v2049, %v2051
        %v2059 = vsel %vm1155, %v2053, %v2055
        %v2064 = vadd.f32 %v2004, %v2056
        %v2065 = vadd.f32 %v2005, %v2057
        %v2066 = vadd.f32 %v2006, %v2058
        %v2067 = vadd.f32 %v2007, %v2059
        %2068 = vset.pattern.permute.xlu0 19
        %2069 = vperm.xlu0 %2068, %v1940
        %v2070 = vpop.permute.xlu0 %2069
        %2072 = vset.pattern.permute.xlu0 19
        %2073 = vperm.xlu0 %2072, %v1941
        %v2074 = vpop.permute.xlu0 %2073
        %2076 = vset.pattern.permute.xlu0 19
        %2077 = vperm.xlu0 %2076, %v1942
        %v2078 = vpop.permute.xlu0 %2077
        %2080 = vset.pattern.permute.xlu0 19
        %2081 = vperm.xlu0 %2080, %v1943
        %v2082 = vpop.permute.xlu0 %2081
        %v2084 = vmul.f32 %v2070, %v181
        %v2085 = vmul.f32 %v2074, %v183
        %v2086 = vmul.f32 %v2078, %v185
        %v2087 = vmul.f32 %v2082, %v187
        %2092 = vrot.lane.b32.xlu0 %v2084, 88
        %v2093 = vpop.permute.xlu0 %2092
        %2094 = vrot.lane.b32.xlu0 %v2085, 88
        %v2095 = vpop.permute.xlu0 %2094
        %2096 = vrot.lane.b32.xlu0 %v2086, 88
        %v2097 = vpop.permute.xlu0 %2096
        %2098 = vrot.lane.b32.xlu0 %v2087, 88
        %v2099 = vpop.permute.xlu0 %2098
        %v2104 = vadd.f32 %v2064, %v2093
        %v2105 = vadd.f32 %v2065, %v2095
        %v2106 = vadd.f32 %v2066, %v2097
        %v2107 = vadd.f32 %v2067, %v2099
        %2112 = vrot.lane.b32.xlu0 %v1429, 56
        %v2113 = vpop.permute.xlu0 %2112
        %2114 = vrot.lane.b32.xlu0 %v1430, 56
        %v2115 = vpop.permute.xlu0 %2114
        %2116 = vrot.lane.b32.xlu0 %v1431, 56
        %v2117 = vpop.permute.xlu0 %2116
        %2118 = vrot.lane.b32.xlu0 %v1432, 56
        %v2119 = vpop.permute.xlu0 %2118
        %2128 = vrot.lane.b32.xlu0 %v1654, 112
        %v2129 = vpop.permute.xlu0 %2128
        %2130 = vrot.lane.b32.xlu0 %v1655, 112
        %v2131 = vpop.permute.xlu0 %2130
        %2132 = vrot.lane.b32.xlu0 %v1656, 112
        %v2133 = vpop.permute.xlu0 %2132
        %2134 = vrot.lane.b32.xlu0 %v1657, 112
        %v2135 = vpop.permute.xlu0 %2134
        %2144 = vrot.lane.b32.xlu0 %v1879, 40
        %v2145 = vpop.permute.xlu0 %2144
        %2146 = vrot.lane.b32.xlu0 %v1880, 40
        %v2147 = vpop.permute.xlu0 %2146
        %2148 = vrot.lane.b32.xlu0 %v1881, 40
        %v2149 = vpop.permute.xlu0 %2148
        %2150 = vrot.lane.b32.xlu0 %v1882, 40
        %v2151 = vpop.permute.xlu0 %2150
        %2160 = vrot.lane.b32.xlu0 %v2104, 96
        %v2161 = vpop.permute.xlu0 %2160
        %2162 = vrot.lane.b32.xlu0 %v2105, 96
        %v2163 = vpop.permute.xlu0 %2162
        %2164 = vrot.lane.b32.xlu0 %v2106, 96
        %v2165 = vpop.permute.xlu0 %2164
        %2166 = vrot.lane.b32.xlu0 %v2107, 96
        %v2167 = vpop.permute.xlu0 %2166
        %vm2172 = vcmask 457728
        %v2173 = vsel %vm2172, %v1204, %v2113
        %v2174 = vsel %vm2172, %v1205, %v2115
        %v2175 = vsel %vm2172, %v1206, %v2117
        %v2176 = vsel %vm2172, %v1207, %v2119
        %v2177 = vsel %vm751, %v2173, %v2129
        %v2178 = vsel %vm751, %v2174, %v2131
        %v2179 = vsel %vm751, %v2175, %v2133
        %v2180 = vsel %vm751, %v2176, %v2135
        %vm2181 = vcmask 326656
        %v2182 = vsel %vm2181, %v2129, %v2145
        %v2183 = vsel %vm2181, %v2131, %v2147
        %v2184 = vsel %vm2181, %v2133, %v2149
        %v2185 = vsel %vm2181, %v2135, %v2151
        %v2186 = vsel %vm542, %v2182, %v2161
        %v2187 = vsel %vm542, %v2183, %v2163
        %v2188 = vsel %vm542, %v2184, %v2165
        %v2189 = vsel %vm542, %v2185, %v2167
        %2190 = vst [vmem:[%s166] sm:$0xff] %v2177
        %2191 = vst [vmem:[%s166 + $0x8] sm:$0xff] %v2186
        %vm2192 = vcmask 195584
        %2193 = vst.msk [vmem:[%s166 + $0x10] sm:$0xff] %vm2192, %v2161
        %2194 = vst [vmem:[%s166 + $0x18] sm:$0xff] %v2178
        %2195 = vst [vmem:[%s166 + $0x20] sm:$0xff] %v2187
        %2196 = vst.msk [vmem:[%s166 + $0x28] sm:$0xff] %vm2192, %v2163
        %2197 = vst [vmem:[%s166 + $0x30] sm:$0xff] %v2179
        %2198 = vst [vmem:[%s166 + $0x38] sm:$0xff] %v2188
        %2199 = vst.msk [vmem:[%s166 + $0x40] sm:$0xff] %vm2192, %v2165
        %2200 = vst [vmem:[%s166 + $0x48] sm:$0xff] %v2180
        %2201 = vst [vmem:[%s166 + $0x50] sm:$0xff] %v2189
        %2202 = vst.msk [vmem:[%s166 + $0x58] sm:$0xff] %vm2192, %v2167
        %s2203 = sand.u32 %s93, 1
        %s2204 = scalar_lea.sflag [#allocation3], %s2203
        %s2205 = sand.u32 %s93, 1
        %s2206 = smul.addr %s2205, 96
        %s2207 = scalar_lea.vmem [#allocation2], %s2206
        // Predicated region
        $region33: #{self_attention_pallas.1} parent=31 // pred_check
          %p2208 = pneg %p103
        $region34: #{self_attention_pallas.1} parent=31 // pred_check_branch
          %2210 = sbr.rel (%p2208) target = $region36
        $region35: #{self_attention_pallas.1} parent=31 // pred_region
          %s2211 = smul.u32 4, %s17
          %2213 = vsyncadd %s2204, 0
          %s2214 = smul.addr %s2211, 3
          %s2215 = smul.addr %s2214, 8
          %s2216 = scalar_lea.hbm %s3, %s2215
          %s2217 = sshll.u32 %s2207, 4
          %s2218 = int_to_ptr.vmem [resolvable:$true] %s2217
          %s2219 = sshll.u32 %s2216, 4
          %s2220 = int_to_ptr.hbm [resolvable:$true] %s2219
          %2225 = dma.vmem_to_hbm [thread:$0]  %s2218, 1536, %s2220, %s2204, 384, 384, 24
        $region36: #{self_attention_pallas.1} parent=31 // pred_fallthru
          _
      $region32: #{self_attention_pallas.1} parent=5 // pred_fallthru
        _
      %p2226 = scmp.le.s32.totalorder 2, %s12
      // Predicated region
      $region37: #{self_attention_pallas.1} parent=5 // pred_check
        %p2227 = pneg %p2226
      $region38: #{self_attention_pallas.1} parent=5 // pred_check_branch
        %2229 = sbr.rel (%p2227) target = $region40
      $region39: #{self_attention_pallas.1} parent=5 // pred_region
        %s2230 = ssub.s32 %s12, 2
        // Predicated region
        $region41: #{self_attention_pallas.1} parent=39 // pred_check
          %p2231 = pneg %p109
        $region42: #{self_attention_pallas.1} parent=39 // pred_check_branch
          %2233 = sbr.rel (%p2231) target = $region44
        $region43: #{self_attention_pallas.1} parent=39 // pred_region
          %s2234 = sand.u32 %s94, 1
          %s2235 = scalar_lea.sflag [#allocation3], %s2234
          %s2236 = sand.u32 %s94, 1
          %s2237 = smul.addr %s2236, 96
          %s2238 = scalar_lea.vmem [#allocation2], %s2237
          %2240 = dma.done %s2235, 1536
        $region44: #{self_attention_pallas.1} parent=39 // pred_fallthru
          _
      $region40: #{self_attention_pallas.1} parent=5 // pred_fallthru
        _
    $region6: #{self_attention_pallas.1} parent=1 // loop_footer
      %s16 = sadd.s32 1, %s12
    $region7: #{self_attention_pallas.1} parent=1 // loop_footer_branch
      %11 = sbr.rel target = $region3
    $region8: #{self_attention_pallas.1} parent=1 // loop_exit
      _
    %2241 = vsyncpa [#allocation3], 1
    %s2242 = scalar_lea.sflag [#allocation3], 1
    %2243 = vsyncpa %s2242, 1

</llo_original>
